<compile_context>
chip_gen: v7x
topology: tpu7x:2x2x1
jax: 0.10.0
libtpu: 0.0.40
codegen_flags: <defaults>
</compile_context>

<pallas_src>
import numpy as np
from functools import partial

import jax
import jax.numpy as jnp
from jax.experimental import pallas as pl
from jax.experimental.pallas import tpu as pltpu


def get_sobel_kernel(k=3):
    rng = np.linspace(-(k // 2), k // 2, k)
    x, y = np.meshgrid(rng, rng)
    sobel_2d_num = x
    sobel_2d_den = x ** 2 + y ** 2
    sobel_2d_den[:, k // 2] = 1
    return sobel_2d_num / sobel_2d_den


def _cdiv(a, b):
    return -(-a // b)


def _choose_plane_block(P, H, W, lanes=128):
    """Pick the plane-block (lane) size from an explicit live-VMEM estimate."""
    ceil8 = lambda v: _cdiv(v, 8) * 8
    # Per-plane live f32 bytes (physically (8,128)-tiled):
    #   2x double-buffered input block + padded scratch + ~7 padded intermediates.
    in_bytes = 2 * H * ceil8(W) * 4
    pad_bytes = (H + 2) * ceil8(W + 2) * 4
    live_per_plane = in_bytes + 8 * pad_bytes
    budget = 20 * 1024 * 1024            # well inside the 32 MiB scoped limit
    bp = (budget // live_per_plane) // lanes * lanes
    bp = int(max(lanes, min(bp, 1024)))
    # never exceed the lane-rounded number of planes
    bp = min(bp, _cdiv(P, lanes) * lanes)
    # keep >= 2 grid steps when there is enough work (v7x: 2 TCs per chip)
    if P > lanes:
        bp = min(bp, max(lanes, _cdiv(_cdiv(P, 2), lanes) * lanes))
    return bp


def _make_si_kernel(H, W, k_sobel, KX, KY):
    out_h = H + 3 - k_sobel            # F.conv2d(stride=1, padding=1) output size
    out_w = W + 3 - k_sobel
    inv_denom = 1.0 / float(out_h * out_w)
    separable = (k_sobel == 3)         # sobel-3 == outer([.5,1,.5], [-1,0,1])

    def kernel(x_ref, o_ref, xp_ref):
        # xp_ref: (H+2, W+2, Bp) f32 zero-padded scratch. Re-zero every step so
        # the border is correct under megacore "parallel" grid sharding, then
        # overwrite the interior from the input block (planes on lanes).
        xp_ref[...] = jnp.zeros_like(xp_ref)
        xp_ref[1:H + 1, 1:W + 1, :] = x_ref[...].astype(jnp.float32)

        if separable:
            # gx = d_x * (s_y * x): vertical smooth [0.5, 1, 0.5], horizontal diff [-1, 0, 1]
            sv = (xp_ref[1:out_h + 1, :, :]
                  + 0.5 * (xp_ref[0:out_h, :, :] + xp_ref[2:out_h + 2, :, :]))   # (out_h, W+2, Bp)
            gx = sv[:, 2:out_w + 2, :] - sv[:, 0:out_w, :]                        # (out_h, out_w, Bp)
            # gy = d_y * (s_x * x): horizontal smooth, vertical diff
            sh = (xp_ref[:, 1:out_w + 1, :]
                  + 0.5 * (xp_ref[:, 0:out_w, :] + xp_ref[:, 2:out_w + 2, :]))   # (H+2, out_w, Bp)
            gy = sh[2:out_h + 2, :, :] - sh[0:out_h, :, :]                        # (out_h, out_w, Bp)
        else:
            # general k: cross-correlation taps, zero taps skipped at trace time
            bq = x_ref.shape[-1]
            gx = jnp.zeros((out_h, out_w, bq), jnp.float32)
            gy = jnp.zeros((out_h, out_w, bq), jnp.float32)
            for i in range(k_sobel):
                for j in range(k_sobel):
                    cx, cy = KX[i][j], KY[i][j]
                    if cx == 0.0 and cy == 0.0:
                        continue
                    win = xp_ref[i:i + out_h, j:j + out_w, :]
                    if cx != 0.0:
                        gx = gx + cx * win
                    if cy != 0.0:
                        gy = gy + cy * win

        sq = gx * gx + gy * gy               # |grad|^2 directly (== value^2)
        v = jnp.sqrt(sq)                     # |grad|
        # spatial reduction over non-lane axes: leading dim first (pure VPU
        # adds), sublane dim last; planes stay on lanes the whole way.
        sum_sq = jnp.sum(jnp.sum(sq, axis=0), axis=0, keepdims=True)   # (1, Bp)
        sum_v = jnp.sum(jnp.sum(v, axis=0), axis=0, keepdims=True)     # (1, Bp)
        mean_sq = sum_sq * inv_denom
        mean = sum_v * inv_denom
        var = jnp.maximum(mean_sq - mean * mean, 0.0)   # clamp fp cancellation
        o_ref[...] = jnp.sqrt(var)                       # lane-dense (1, Bp) store

    return kernel


@partial(jax.jit, static_argnames=("k_sobel", "plane_block"))
def si_forward(x, k_sobel=3, plane_block=None):
    """x: (N, C, H, W) -> (N, C) float32 (std of sobel gradient magnitude per plane)."""
    N, C, H, W = x.shape
    P = N * C

    kx_np = get_sobel_kernel(k_sobel).astype(np.float32)
    ky_np = kx_np.T.copy()
    KX = [[float(kx_np[i, j]) for j in range(k_sobel)] for i in range(k_sobel)]
    KY = [[float(ky_np[i, j]) for j in range(k_sobel)] for i in range(k_sobel)]

    Bp = plane_block if plane_block is not None else _choose_plane_block(P, H, W)
    G = _cdiv(P, Bp)
    P_pad = G * Bp

    # Planes on the lane axis: (N, C, H, W) -> (H, W, P), padded to a multiple
    # of Bp along the (lane) plane axis.  Done once in the (jitted) wrapper.
    xt = jnp.transpose(x, (2, 3, 0, 1)).reshape(H, W, P)
    if P_pad != P:
        xt = jnp.pad(xt, ((0, 0), (0, 0), (0, P_pad - P)))

    out = pl.pallas_call(
        _make_si_kernel(H, W, k_sobel, KX, KY),
        out_shape=jax.ShapeDtypeStruct((1, P_pad), jnp.float32),
        grid_spec=pltpu.PrefetchScalarGridSpec(
            num_scalar_prefetch=0,
            grid=(G,),
            in_specs=[pl.BlockSpec((H, W, Bp), lambda g: (0, 0, g))],
            out_specs=pl.BlockSpec((1, Bp), lambda g: (0, g)),
            scratch_shapes=[pltpu.VMEM((H + 2, W + 2, Bp), jnp.float32)],
        ),
        compiler_params=pltpu.CompilerParams(
            dimension_semantics=("parallel",),
            vmem_limit_bytes=32 * 1024 * 1024,
        ),
    )(xt)

    return out[0, :P].reshape(N, C)


def si_reference(x, k_sobel=3):
    """Pure-JAX reference (depthwise conv) for validation."""
    N, C, H, W = x.shape
    kx = jnp.asarray(get_sobel_kernel(k_sobel), dtype=jnp.float32)
    ky = kx.T
    wx = jnp.broadcast_to(kx[None, None], (C, 1, k_sobel, k_sobel))
    wy = jnp.broadcast_to(ky[None, None], (C, 1, k_sobel, k_sobel))
    dn = jax.lax.conv_dimension_numbers(x.shape, wx.shape, ("NCHW", "OIHW", "NCHW"))
    xf = x.astype(jnp.float32)
    gx = jax.lax.conv_general_dilated(xf, wx, (1, 1), ((1, 1), (1, 1)),
                                      dimension_numbers=dn, feature_group_count=C)
    gy = jax.lax.conv_general_dilated(xf, wy, (1, 1), ((1, 1), (1, 1)),
                                      dimension_numbers=dn, feature_group_count=C)
    v = jnp.sqrt(gx ** 2 + gy ** 2)
    denom = v.shape[2] * v.shape[3]
    out = jnp.sum(v ** 2, axis=(2, 3)) / denom - (jnp.sum(v, axis=(2, 3)) / denom) ** 2
    return jnp.sqrt(out)


if __name__ == "__main__":
    key = jax.random.PRNGKey(0)
    N, C, H, W = 2, 4, 16, 16
    x = jax.random.normal(key, (N, C, H, W), dtype=jnp.float32)

    out = jax.block_until_ready(si_forward(x, k_sobel=3))

    ref = jax.block_until_ready(si_reference(x, k_sobel=3))
    np.testing.assert_allclose(np.asarray(out), np.asarray(ref),
                               rtol=1e-4, atol=1e-5)
    assert out.shape == (N, C)
    print("KERNEL_OK")
</pallas_src>

<mosaic_0001>
module attributes {stable_mosaic.version = 11 : i64} {
  func.func @kernel(%arg0: i32, %arg1: memref<16x16x128xf32, #tpu.memory_space<vmem>>, %arg2: memref<1x128xf32, #tpu.memory_space<vmem>>, %arg3: memref<18x18x128xf32, #tpu.memory_space<vmem>>) attributes {dimension_semantics = [#tpu.dimension_semantics<parallel>], iteration_bounds = array<i64: 1>, scalar_prefetch = 0 : i64, scratch_operands = 1 : i64, tpu.core_type = #tpu.core_type<tc>, window_params = [{transform_indices = @transform_0, window_bounds = array<i64: 16, 16, 128>}, {transform_indices = @transform_1, window_bounds = array<i64: 1, 128>}]} {
    %cst = arith.constant 0.000000e+00 : f32
    %0 = vector.broadcast %cst : f32 to vector<18x18x128xf32>
    %c0 = arith.constant 0 : index
    %c0_0 = arith.constant 0 : index
    %c0_1 = arith.constant 0 : index
    %1 = vector.load %arg3[%c0, %c0_0, %c0_1] : memref<18x18x128xf32, #tpu.memory_space<vmem>>, vector<18x18x128xf32>
    tpu.vector_store %arg3[%c0, %c0_0, %c0_1], %0 {strides = array<i32>} : memref<18x18x128xf32, #tpu.memory_space<vmem>>, vector<18x18x128xf32>,
    %c0_2 = arith.constant 0 : index
    %c0_3 = arith.constant 0 : index
    %c0_4 = arith.constant 0 : index
    %2 = vector.load %arg1[%c0_2, %c0_3, %c0_4] : memref<16x16x128xf32, #tpu.memory_space<vmem>>, vector<16x16x128xf32>
    %c1 = arith.constant 1 : index
    %c1_5 = arith.constant 1 : index
    %c0_6 = arith.constant 0 : index
    %3 = vector.load %arg3[%c1, %c1_5, %c0_6] : memref<18x18x128xf32, #tpu.memory_space<vmem>>, vector<16x16x128xf32>
    tpu.vector_store %arg3[%c1, %c1_5, %c0_6], %2 {strides = array<i32>} : memref<18x18x128xf32, #tpu.memory_space<vmem>>, vector<16x16x128xf32>,
    %c1_7 = arith.constant 1 : index
    %c0_8 = arith.constant 0 : index
    %c0_9 = arith.constant 0 : index
    %4 = vector.load %arg3[%c1_7, %c0_8, %c0_9] : memref<18x18x128xf32, #tpu.memory_space<vmem>>, vector<16x18x128xf32>
    %c0_10 = arith.constant 0 : index
    %c0_11 = arith.constant 0 : index
    %c0_12 = arith.constant 0 : index
    %5 = vector.load %arg3[%c0_10, %c0_11, %c0_12] : memref<18x18x128xf32, #tpu.memory_space<vmem>>, vector<16x18x128xf32>
    %c2 = arith.constant 2 : index
    %c0_13 = arith.constant 0 : index
    %c0_14 = arith.constant 0 : index
    %6 = vector.load %arg3[%c2, %c0_13, %c0_14] : memref<18x18x128xf32, #tpu.memory_space<vmem>>, vector<16x18x128xf32>
    %7 = arith.addf %5, %6 : vector<16x18x128xf32>
    %cst_15 = arith.constant 5.000000e-01 : f32
    %8 = vector.broadcast %cst_15 : f32 to vector<16x18x128xf32>
    %9 = arith.mulf %8, %7 : vector<16x18x128xf32>
    %10 = arith.addf %4, %9 : vector<16x18x128xf32>
    %11 = vector.extract_strided_slice %10 {offsets = [0, 2, 0], sizes = [16, 16, 128], strides = [1, 1, 1]} : vector<16x18x128xf32> to vector<16x16x128xf32>
    %12 = vector.extract_strided_slice %10 {offsets = [0, 0, 0], sizes = [16, 16, 128], strides = [1, 1, 1]} : vector<16x18x128xf32> to vector<16x16x128xf32>
    %13 = arith.subf %11, %12 : vector<16x16x128xf32>
    %c0_16 = arith.constant 0 : index
    %c1_17 = arith.constant 1 : index
    %c0_18 = arith.constant 0 : index
    %14 = vector.load %arg3[%c0_16, %c1_17, %c0_18] : memref<18x18x128xf32, #tpu.memory_space<vmem>>, vector<18x16x128xf32>
    %c0_19 = arith.constant 0 : index
    %c0_20 = arith.constant 0 : index
    %c0_21 = arith.constant 0 : index
    %15 = vector.load %arg3[%c0_19, %c0_20, %c0_21] : memref<18x18x128xf32, #tpu.memory_space<vmem>>, vector<18x16x128xf32>
    %c0_22 = arith.constant 0 : index
    %c2_23 = arith.constant 2 : index
    %c0_24 = arith.constant 0 : index
    %16 = vector.load %arg3[%c0_22, %c2_23, %c0_24] : memref<18x18x128xf32, #tpu.memory_space<vmem>>, vector<18x16x128xf32>
    %17 = arith.addf %15, %16 : vector<18x16x128xf32>
    %cst_25 = arith.constant 5.000000e-01 : f32
    %18 = vector.broadcast %cst_25 : f32 to vector<18x16x128xf32>
    %19 = arith.mulf %18, %17 : vector<18x16x128xf32>
    %20 = arith.addf %14, %19 : vector<18x16x128xf32>
    %21 = vector.extract_strided_slice %20 {offsets = [2, 0, 0], sizes = [16, 16, 128], strides = [1, 1, 1]} : vector<18x16x128xf32> to vector<16x16x128xf32>
    %22 = vector.extract_strided_slice %20 {offsets = [0, 0, 0], sizes = [16, 16, 128], strides = [1, 1, 1]} : vector<18x16x128xf32> to vector<16x16x128xf32>
    %23 = arith.subf %21, %22 : vector<16x16x128xf32>
    %24 = arith.mulf %13, %13 : vector<16x16x128xf32>
    %25 = arith.mulf %23, %23 : vector<16x16x128xf32>
    %26 = arith.addf %24, %25 : vector<16x16x128xf32>
    %27 = math.sqrt %26 : vector<16x16x128xf32>
    %cst_26 = arith.constant dense<0.000000e+00> : vector<16x128xf32>
    %28 = vector.multi_reduction <add>, %26, %cst_26 [0] : vector<16x16x128xf32> to vector<16x128xf32>
    %cst_27 = arith.constant dense<0.000000e+00> : vector<128xf32>
    %29 = vector.multi_reduction <add>, %28, %cst_27 [0] : vector<16x128xf32> to vector<128xf32>
    %30 = vector.shape_cast %29 : vector<128xf32> to vector<1x128xf32>
    %cst_28 = arith.constant dense<0.000000e+00> : vector<16x128xf32>
    %31 = vector.multi_reduction <add>, %27, %cst_28 [0] : vector<16x16x128xf32> to vector<16x128xf32>
    %cst_29 = arith.constant dense<0.000000e+00> : vector<128xf32>
    %32 = vector.multi_reduction <add>, %31, %cst_29 [0] : vector<16x128xf32> to vector<128xf32>
    %33 = vector.shape_cast %32 : vector<128xf32> to vector<1x128xf32>
    %cst_30 = arith.constant 3.906250e-03 : f32
    %34 = vector.broadcast %cst_30 : f32 to vector<1x128xf32>
    %35 = arith.mulf %30, %34 : vector<1x128xf32>
    %cst_31 = arith.constant 3.906250e-03 : f32
    %36 = vector.broadcast %cst_31 : f32 to vector<1x128xf32>
    %37 = arith.mulf %33, %36 : vector<1x128xf32>
    %38 = arith.mulf %37, %37 : vector<1x128xf32>
    %39 = arith.subf %35, %38 : vector<1x128xf32>
    %cst_32 = arith.constant 0.000000e+00 : f32
    %40 = vector.broadcast %cst_32 : f32 to vector<1x128xf32>
    %41 = arith.maximumf %39, %40 : vector<1x128xf32>
    %42 = math.sqrt %41 : vector<1x128xf32>
    %c0_33 = arith.constant 0 : index
    %c0_34 = arith.constant 0 : index
    %43 = vector.load %arg2[%c0_33, %c0_34] : memref<1x128xf32, #tpu.memory_space<vmem>>, vector<1x128xf32>
    tpu.vector_store %arg2[%c0_33, %c0_34], %42 {strides = array<i32>} : memref<1x128xf32, #tpu.memory_space<vmem>>, vector<1x128xf32>,
    return
  }
  func.func @transform_0(%arg0: i32) -> (i32, i32, i32) {
    %c0_i32 = arith.constant 0 : i32
    %c0_i32_0 = arith.constant 0 : i32
    %c0_i32_1 = arith.constant 0 : i32
    return %c0_i32, %c0_i32_0, %arg0 : i32, i32, i32
  }
  func.func @transform_1(%arg0: i32) -> (i32, i32) {
    %c0_i32 = arith.constant 0 : i32
    %c0_i32_0 = arith.constant 0 : i32
    return %c0_i32, %arg0 : i32, i32
  }
}

</mosaic_0001>

<llo_original>
// kernel: squeeze.1
$region0: #{squeeze.1}
  %s0 = inlined_call_operand.vmem [shape: f32[8], index: 0, kind: input, shape index: {}]
  %s1 = inlined_call_operand.hbm [shape: f32[2,4], index: 1, kind: output, shape index: {}]
  $region1: #{squeeze.1} parent=0
    #allocation0 [shape = 'u8[1024]{0}', space=vmem, size = 0x400, scoped, tag = 'operand span for operand 1']
    #allocation1 [shape = 's32[1]{0}', space=sflag, size = 0x4, scoped, tag = 'scoped memory for squeeze.1']
    #allocation2 [shape = 'u8[4096]{0}', space=vmem, size = 0x1000, scoped, tag = 'scoped mem for output reshape']
    #allocation3 [shape = 'u8[4096]{0}', space=vmem, size = 0x1000, scoped, tag = 'scoped mem for input reshape']
    %2 = vsyncpa [#allocation1], 0
    %s4 = sshllo.u32 0, 1
    %v5 = vld [vmem:[%s0] sm:%s4]
    %6 = vst [vmem:[#allocation3] sm:%s4] %v5
    %v7 = vld [vmem:[#allocation3] sm:$0x1]
    %vm8 = vcmask 31744
    %9 = vst.msk [vmem:[#allocation2] sm:$0x1] %vm8, %v7
    %v10 = vld [vmem:[#allocation3] sm:$0x1]
    %11 = vrot.lane.b32.xlu0 %v10, 124
    %v12 = vpop.permute.xlu0 %11
    %vm13 = vcmask 31744
    %s14 = scalar_lea.vmem [#allocation2], 1
    %15 = vst.msk [vmem:[%s14] sm:$0x1] %vm13, %v12
    %s17 = sshllo.u32 0, 2
    %v19 = vld [vmem:[#allocation2] sm:%s17]
    %s20 = sshllo.u32 0, 2
    %21 = vst [vmem:[#allocation0] sm:%s20] %v19
    %s23 = ssub.s32 32, 32
    %24 = vsyncadd [#allocation1], %s23
    %s26 = sshll.u32 [#allocation0], 4
    %s27 = int_to_ptr.vmem [resolvable:$true] %s26
    %29 = dma.vmem_to_hbm [thread:$0]  %s27, 32, %s1, [#allocation1]
    %30 = dma.done [#allocation1], 32
    %31 = vsyncpa [#allocation1], 1

// kernel: si_forward.1
$region0: #{si_forward.1}
  #allocation0 [shape = 'u32[]', space=smem, size = 0x4, offset = 0x4, fixed_abs, tag = 'smem constant byte address 0x4 - core index']
  #allocation1 [shape = 'u32[144,128]{1,0:T(1,128)}', space=vmem, size = 0x12000, scoped, tag = 'internal scratch']
  #allocation2 [shape = 'f32[18,18,128]{2,1,0:T(8,128)}', space=vmem, size = 0x36000, scoped, tag = 'scratch operand']
  %s0 = inlined_call_operand.vmem [shape: f32[16,16,128], index: 0, kind: input, shape index: {}]
  %s1 = inlined_call_operand.vmem [shape: f32[1,128], index: 1, kind: output, shape index: {}]
  %s2 = sld [smem:[#allocation0]]
  $region14: #{si_forward.1} parent=0
    _
  %s4 = ssub.s32 1, %s2
  %s5 = scalar_select 0, %s4, %s2
  // Predicated region
  $region2: #{si_forward.1} parent=0 // pred_check
    _
  $region3: #{si_forward.1} parent=0 // pred_check_branch
    %7 = sbr.rel (0) target = $region5
  $region4: #{si_forward.1} parent=0 // pred_region
    _
  $region5: #{si_forward.1} parent=0 // pred_fallthru
    _
  %8 = vst [vmem:[#allocation2] sm:$0xff] 0.0
  %9 = vst [vmem:[#allocation2 + $0x8] sm:$0xff] 0.0
  %10 = vst [vmem:[#allocation2 + $0x10] sm:$0x3] 0.0
  %11 = vst [vmem:[#allocation2 + $0x18] sm:$0xff] 0.0
  %12 = vst [vmem:[#allocation2 + $0x20] sm:$0xff] 0.0
  %13 = vst [vmem:[#allocation2 + $0x28] sm:$0x3] 0.0
  %14 = vst [vmem:[#allocation2 + $0x30] sm:$0xff] 0.0
  %15 = vst [vmem:[#allocation2 + $0x38] sm:$0xff] 0.0
  %16 = vst [vmem:[#allocation2 + $0x40] sm:$0x3] 0.0
  %17 = vst [vmem:[#allocation2 + $0x48] sm:$0xff] 0.0
  %18 = vst [vmem:[#allocation2 + $0x50] sm:$0xff] 0.0
  %19 = vst [vmem:[#allocation2 + $0x58] sm:$0x3] 0.0
  %20 = vst [vmem:[#allocation2 + $0x60] sm:$0xff] 0.0
  %21 = vst [vmem:[#allocation2 + $0x68] sm:$0xff] 0.0
  %22 = vst [vmem:[#allocation2 + $0x70] sm:$0x3] 0.0
  %23 = vst [vmem:[#allocation2 + $0x78] sm:$0xff] 0.0
  %24 = vst [vmem:[#allocation2 + $0x80] sm:$0xff] 0.0
  %25 = vst [vmem:[#allocation2 + $0x88] sm:$0x3] 0.0
  %26 = vst [vmem:[#allocation2 + $0x90] sm:$0xff] 0.0
  %27 = vst [vmem:[#allocation2 + $0x98] sm:$0xff] 0.0
  %28 = vst [vmem:[#allocation2 + $0xa0] sm:$0x3] 0.0
  %29 = vst [vmem:[#allocation2 + $0xa8] sm:$0xff] 0.0
  %30 = vst [vmem:[#allocation2 + $0xb0] sm:$0xff] 0.0
  %31 = vst [vmem:[#allocation2 + $0xb8] sm:$0x3] 0.0
  %32 = vst [vmem:[#allocation2 + $0xc0] sm:$0xff] 0.0
  %33 = vst [vmem:[#allocation2 + $0xc8] sm:$0xff] 0.0
  %34 = vst [vmem:[#allocation2 + $0xd0] sm:$0x3] 0.0
  %35 = vst [vmem:[#allocation2 + $0xd8] sm:$0xff] 0.0
  %36 = vst [vmem:[#allocation2 + $0xe0] sm:$0xff] 0.0
  %37 = vst [vmem:[#allocation2 + $0xe8] sm:$0x3] 0.0
  %38 = vst [vmem:[#allocation2 + $0xf0] sm:$0xff] 0.0
  %39 = vst [vmem:[#allocation2 + $0xf8] sm:$0xff] 0.0
  %40 = vst [vmem:[#allocation2 + $0x100] sm:$0x3] 0.0
  %41 = vst [vmem:[#allocation2 + $0x108] sm:$0xff] 0.0
  %42 = vst [vmem:[#allocation2 + $0x110] sm:$0xff] 0.0
  %43 = vst [vmem:[#allocation2 + $0x118] sm:$0x3] 0.0
  %44 = vst [vmem:[#allocation2 + $0x120] sm:$0xff] 0.0
  %45 = vst [vmem:[#allocation2 + $0x128] sm:$0xff] 0.0
  %46 = vst [vmem:[#allocation2 + $0x130] sm:$0x3] 0.0
  %47 = vst [vmem:[#allocation2 + $0x138] sm:$0xff] 0.0
  %48 = vst [vmem:[#allocation2 + $0x140] sm:$0xff] 0.0
  %49 = vst [vmem:[#allocation2 + $0x148] sm:$0x3] 0.0
  %50 = vst [vmem:[#allocation2 + $0x150] sm:$0xff] 0.0
  %51 = vst [vmem:[#allocation2 + $0x158] sm:$0xff] 0.0
  %52 = vst [vmem:[#allocation2 + $0x160] sm:$0x3] 0.0
  %53 = vst [vmem:[#allocation2 + $0x168] sm:$0xff] 0.0
  %54 = vst [vmem:[#allocation2 + $0x170] sm:$0xff] 0.0
  %55 = vst [vmem:[#allocation2 + $0x178] sm:$0x3] 0.0
  %56 = vst [vmem:[#allocation2 + $0x180] sm:$0xff] 0.0
  %57 = vst [vmem:[#allocation2 + $0x188] sm:$0xff] 0.0
  %58 = vst [vmem:[#allocation2 + $0x190] sm:$0x3] 0.0
  %59 = vst [vmem:[#allocation2 + $0x198] sm:$0xff] 0.0
  %60 = vst [vmem:[#allocation2 + $0x1a0] sm:$0xff] 0.0
  %61 = vst [vmem:[#allocation2 + $0x1a8] sm:$0x3] 0.0
  %v62 = vld [vmem:[%s0] sm:$0xff]
  %v63 = vld [vmem:[%s0 + $0x8] sm:$0xff]
  %v64 = vld [vmem:[%s0 + $0x10] sm:$0xff]
  %v65 = vld [vmem:[%s0 + $0x18] sm:$0xff]
  %v66 = vld [vmem:[%s0 + $0x20] sm:$0xff]
  %v67 = vld [vmem:[%s0 + $0x28] sm:$0xff]
  %v68 = vld [vmem:[%s0 + $0x30] sm:$0xff]
  %v69 = vld [vmem:[%s0 + $0x38] sm:$0xff]
  %v70 = vld [vmem:[%s0 + $0x40] sm:$0xff]
  %v71 = vld [vmem:[%s0 + $0x48] sm:$0xff]
  %v72 = vld [vmem:[%s0 + $0x50] sm:$0xff]
  %v73 = vld [vmem:[%s0 + $0x58] sm:$0xff]
  %v74 = vld [vmem:[%s0 + $0x60] sm:$0xff]
  %v75 = vld [vmem:[%s0 + $0x68] sm:$0xff]
  %v76 = vld [vmem:[%s0 + $0x70] sm:$0xff]
  %v77 = vld [vmem:[%s0 + $0x78] sm:$0xff]
  %v78 = vld [vmem:[%s0 + $0x80] sm:$0xff]
  %v79 = vld [vmem:[%s0 + $0x88] sm:$0xff]
  %v80 = vld [vmem:[%s0 + $0x90] sm:$0xff]
  %v81 = vld [vmem:[%s0 + $0x98] sm:$0xff]
  %v82 = vld [vmem:[%s0 + $0xa0] sm:$0xff]
  %v83 = vld [vmem:[%s0 + $0xa8] sm:$0xff]
  %v84 = vld [vmem:[%s0 + $0xb0] sm:$0xff]
  %v85 = vld [vmem:[%s0 + $0xb8] sm:$0xff]
  %v86 = vld [vmem:[%s0 + $0xc0] sm:$0xff]
  %v87 = vld [vmem:[%s0 + $0xc8] sm:$0xff]
  %v88 = vld [vmem:[%s0 + $0xd0] sm:$0xff]
  %v89 = vld [vmem:[%s0 + $0xd8] sm:$0xff]
  %v90 = vld [vmem:[%s0 + $0xe0] sm:$0xff]
  %v91 = vld [vmem:[%s0 + $0xe8] sm:$0xff]
  %v92 = vld [vmem:[%s0 + $0xf0] sm:$0xff]
  %v93 = vld [vmem:[%s0 + $0xf8] sm:$0xff]
  %s94 = scalar_lea.vmem [#allocation2], 24
  %95 = vst [vmem:[%s94 + $0x1] sm:$0xff] %v62
  %96 = vst [vmem:[%s94 + $0x9] sm:$0xff] %v63
  %97 = vst [vmem:[%s94 + $0x19] sm:$0xff] %v64
  %98 = vst [vmem:[%s94 + $0x21] sm:$0xff] %v65
  %99 = vst [vmem:[%s94 + $0x31] sm:$0xff] %v66
  %100 = vst [vmem:[%s94 + $0x39] sm:$0xff] %v67
  %101 = vst [vmem:[%s94 + $0x49] sm:$0xff] %v68
  %102 = vst [vmem:[%s94 + $0x51] sm:$0xff] %v69
  %103 = vst [vmem:[%s94 + $0x61] sm:$0xff] %v70
  %104 = vst [vmem:[%s94 + $0x69] sm:$0xff] %v71
  %105 = vst [vmem:[%s94 + $0x79] sm:$0xff] %v72
  %106 = vst [vmem:[%s94 + $0x81] sm:$0xff] %v73
  %107 = vst [vmem:[%s94 + $0x91] sm:$0xff] %v74
  %108 = vst [vmem:[%s94 + $0x99] sm:$0xff] %v75
  %109 = vst [vmem:[%s94 + $0xa9] sm:$0xff] %v76
  %110 = vst [vmem:[%s94 + $0xb1] sm:$0xff] %v77
  %111 = vst [vmem:[%s94 + $0xc1] sm:$0xff] %v78
  %112 = vst [vmem:[%s94 + $0xc9] sm:$0xff] %v79
  %113 = vst [vmem:[%s94 + $0xd9] sm:$0xff] %v80
  %114 = vst [vmem:[%s94 + $0xe1] sm:$0xff] %v81
  %115 = vst [vmem:[%s94 + $0xf1] sm:$0xff] %v82
  %116 = vst [vmem:[%s94 + $0xf9] sm:$0xff] %v83
  %117 = vst [vmem:[%s94 + $0x109] sm:$0xff] %v84
  %118 = vst [vmem:[%s94 + $0x111] sm:$0xff] %v85
  %119 = vst [vmem:[%s94 + $0x121] sm:$0xff] %v86
  %120 = vst [vmem:[%s94 + $0x129] sm:$0xff] %v87
  %121 = vst [vmem:[%s94 + $0x139] sm:$0xff] %v88
  %122 = vst [vmem:[%s94 + $0x141] sm:$0xff] %v89
  %123 = vst [vmem:[%s94 + $0x151] sm:$0xff] %v90
  %124 = vst [vmem:[%s94 + $0x159] sm:$0xff] %v91
  %125 = vst [vmem:[%s94 + $0x169] sm:$0xff] %v92
  %126 = vst [vmem:[%s94 + $0x171] sm:$0xff] %v93
  %v127 = vld [vmem:[%s94] sm:$0xff]
  %v128 = vld [vmem:[%s94 + $0x8] sm:$0xff]
  %v129 = vld [vmem:[%s94 + $0x10] sm:$0x3]
  %v130 = vld [vmem:[%s94 + $0x18] sm:$0xff]
  %v131 = vld [vmem:[%s94 + $0x20] sm:$0xff]
  %v132 = vld [vmem:[%s94 + $0x28] sm:$0x3]
  %v133 = vld [vmem:[%s94 + $0x30] sm:$0xff]
  %v134 = vld [vmem:[%s94 + $0x38] sm:$0xff]
  %v135 = vld [vmem:[%s94 + $0x40] sm:$0x3]
  %v136 = vld [vmem:[%s94 + $0x48] sm:$0xff]
  %v137 = vld [vmem:[%s94 + $0x50] sm:$0xff]
  %v138 = vld [vmem:[%s94 + $0x58] sm:$0x3]
  %v139 = vld [vmem:[%s94 + $0x60] sm:$0xff]
  %v140 = vld [vmem:[%s94 + $0x68] sm:$0xff]
  %v141 = vld [vmem:[%s94 + $0x70] sm:$0x3]
  %v142 = vld [vmem:[%s94 + $0x78] sm:$0xff]
  %v143 = vld [vmem:[%s94 + $0x80] sm:$0xff]
  %v144 = vld [vmem:[%s94 + $0x88] sm:$0x3]
  %v145 = vld [vmem:[%s94 + $0x90] sm:$0xff]
  %v146 = vld [vmem:[%s94 + $0x98] sm:$0xff]
  %v147 = vld [vmem:[%s94 + $0xa0] sm:$0x3]
  %v148 = vld [vmem:[%s94 + $0xa8] sm:$0xff]
  %v149 = vld [vmem:[%s94 + $0xb0] sm:$0xff]
  %v150 = vld [vmem:[%s94 + $0xb8] sm:$0x3]
  %v151 = vld [vmem:[%s94 + $0xc0] sm:$0xff]
  %v152 = vld [vmem:[%s94 + $0xc8] sm:$0xff]
  %v153 = vld [vmem:[%s94 + $0xd0] sm:$0x3]
  %v154 = vld [vmem:[%s94 + $0xd8] sm:$0xff]
  %v155 = vld [vmem:[%s94 + $0xe0] sm:$0xff]
  %v156 = vld [vmem:[%s94 + $0xe8] sm:$0x3]
  %v157 = vld [vmem:[%s94 + $0xf0] sm:$0xff]
  %v158 = vld [vmem:[%s94 + $0xf8] sm:$0xff]
  %v159 = vld [vmem:[%s94 + $0x100] sm:$0x3]
  %v160 = vld [vmem:[%s94 + $0x108] sm:$0xff]
  %v161 = vld [vmem:[%s94 + $0x110] sm:$0xff]
  %v162 = vld [vmem:[%s94 + $0x118] sm:$0x3]
  %v163 = vld [vmem:[%s94 + $0x120] sm:$0xff]
  %v164 = vld [vmem:[%s94 + $0x128] sm:$0xff]
  %v165 = vld [vmem:[%s94 + $0x130] sm:$0x3]
  %v166 = vld [vmem:[%s94 + $0x138] sm:$0xff]
  %v167 = vld [vmem:[%s94 + $0x140] sm:$0xff]
  %v168 = vld [vmem:[%s94 + $0x148] sm:$0x3]
  %v169 = vld [vmem:[%s94 + $0x150] sm:$0xff]
  %v170 = vld [vmem:[%s94 + $0x158] sm:$0xff]
  %v171 = vld [vmem:[%s94 + $0x160] sm:$0x3]
  %v172 = vld [vmem:[%s94 + $0x168] sm:$0xff]
  %v173 = vld [vmem:[%s94 + $0x170] sm:$0xff]
  %v174 = vld [vmem:[%s94 + $0x178] sm:$0x3]
  %v175 = vld [vmem:[#allocation2] sm:$0xff]
  %v176 = vld [vmem:[#allocation2 + $0x8] sm:$0xff]
  %v177 = vld [vmem:[#allocation2 + $0x10] sm:$0x3]
  %v178 = vld [vmem:[#allocation2 + $0x18] sm:$0xff]
  %v179 = vld [vmem:[#allocation2 + $0x20] sm:$0xff]
  %v180 = vld [vmem:[#allocation2 + $0x28] sm:$0x3]
  %v181 = vld [vmem:[#allocation2 + $0x30] sm:$0xff]
  %v182 = vld [vmem:[#allocation2 + $0x38] sm:$0xff]
  %v183 = vld [vmem:[#allocation2 + $0x40] sm:$0x3]
  %v184 = vld [vmem:[#allocation2 + $0x48] sm:$0xff]
  %v185 = vld [vmem:[#allocation2 + $0x50] sm:$0xff]
  %v186 = vld [vmem:[#allocation2 + $0x58] sm:$0x3]
  %v187 = vld [vmem:[#allocation2 + $0x60] sm:$0xff]
  %v188 = vld [vmem:[#allocation2 + $0x68] sm:$0xff]
  %v189 = vld [vmem:[#allocation2 + $0x70] sm:$0x3]
  %v190 = vld [vmem:[#allocation2 + $0x78] sm:$0xff]
  %v191 = vld [vmem:[#allocation2 + $0x80] sm:$0xff]
  %v192 = vld [vmem:[#allocation2 + $0x88] sm:$0x3]
  %v193 = vld [vmem:[#allocation2 + $0x90] sm:$0xff]
  %v194 = vld [vmem:[#allocation2 + $0x98] sm:$0xff]
  %v195 = vld [vmem:[#allocation2 + $0xa0] sm:$0x3]
  %v196 = vld [vmem:[#allocation2 + $0xa8] sm:$0xff]
  %v197 = vld [vmem:[#allocation2 + $0xb0] sm:$0xff]
  %v198 = vld [vmem:[#allocation2 + $0xb8] sm:$0x3]
  %v199 = vld [vmem:[#allocation2 + $0xc0] sm:$0xff]
  %v200 = vld [vmem:[#allocation2 + $0xc8] sm:$0xff]
  %v201 = vld [vmem:[#allocation2 + $0xd0] sm:$0x3]
  %v202 = vld [vmem:[#allocation2 + $0xd8] sm:$0xff]
  %v203 = vld [vmem:[#allocation2 + $0xe0] sm:$0xff]
  %v204 = vld [vmem:[#allocation2 + $0xe8] sm:$0x3]
  %v205 = vld [vmem:[#allocation2 + $0xf0] sm:$0xff]
  %v206 = vld [vmem:[#allocation2 + $0xf8] sm:$0xff]
  %v207 = vld [vmem:[#allocation2 + $0x100] sm:$0x3]
  %v208 = vld [vmem:[#allocation2 + $0x108] sm:$0xff]
  %v209 = vld [vmem:[#allocation2 + $0x110] sm:$0xff]
  %v210 = vld [vmem:[#allocation2 + $0x118] sm:$0x3]
  %v211 = vld [vmem:[#allocation2 + $0x120] sm:$0xff]
  %v212 = vld [vmem:[#allocation2 + $0x128] sm:$0xff]
  %v213 = vld [vmem:[#allocation2 + $0x130] sm:$0x3]
  %v214 = vld [vmem:[#allocation2 + $0x138] sm:$0xff]
  %v215 = vld [vmem:[#allocation2 + $0x140] sm:$0xff]
  %v216 = vld [vmem:[#allocation2 + $0x148] sm:$0x3]
  %v217 = vld [vmem:[#allocation2 + $0x150] sm:$0xff]
  %v218 = vld [vmem:[#allocation2 + $0x158] sm:$0xff]
  %v219 = vld [vmem:[#allocation2 + $0x160] sm:$0x3]
  %v220 = vld [vmem:[#allocation2 + $0x168] sm:$0xff]
  %v221 = vld [vmem:[#allocation2 + $0x170] sm:$0xff]
  %v222 = vld [vmem:[#allocation2 + $0x178] sm:$0x3]
  %s223 = scalar_lea.vmem [#allocation2], 48
  %v224 = vld [vmem:[%s223] sm:$0xff]
  %v225 = vld [vmem:[%s223 + $0x8] sm:$0xff]
  %v226 = vld [vmem:[%s223 + $0x10] sm:$0x3]
  %v227 = vld [vmem:[%s223 + $0x18] sm:$0xff]
  %v228 = vld [vmem:[%s223 + $0x20] sm:$0xff]
  %v229 = vld [vmem:[%s223 + $0x28] sm:$0x3]
  %v230 = vld [vmem:[%s223 + $0x30] sm:$0xff]
  %v231 = vld [vmem:[%s223 + $0x38] sm:$0xff]
  %v232 = vld [vmem:[%s223 + $0x40] sm:$0x3]
  %v233 = vld [vmem:[%s223 + $0x48] sm:$0xff]
  %v234 = vld [vmem:[%s223 + $0x50] sm:$0xff]
  %v235 = vld [vmem:[%s223 + $0x58] sm:$0x3]
  %v236 = vld [vmem:[%s223 + $0x60] sm:$0xff]
  %v237 = vld [vmem:[%s223 + $0x68] sm:$0xff]
  %v238 = vld [vmem:[%s223 + $0x70] sm:$0x3]
  %v239 = vld [vmem:[%s223 + $0x78] sm:$0xff]
  %v240 = vld [vmem:[%s223 + $0x80] sm:$0xff]
  %v241 = vld [vmem:[%s223 + $0x88] sm:$0x3]
  %v242 = vld [vmem:[%s223 + $0x90] sm:$0xff]
  %v243 = vld [vmem:[%s223 + $0x98] sm:$0xff]
  %v244 = vld [vmem:[%s223 + $0xa0] sm:$0x3]
  %v245 = vld [vmem:[%s223 + $0xa8] sm:$0xff]
  %v246 = vld [vmem:[%s223 + $0xb0] sm:$0xff]
  %v247 = vld [vmem:[%s223 + $0xb8] sm:$0x3]
  %v248 = vld [vmem:[%s223 + $0xc0] sm:$0xff]
  %v249 = vld [vmem:[%s223 + $0xc8] sm:$0xff]
  %v250 = vld [vmem:[%s223 + $0xd0] sm:$0x3]
  %v251 = vld [vmem:[%s223 + $0xd8] sm:$0xff]
  %v252 = vld [vmem:[%s223 + $0xe0] sm:$0xff]
  %v253 = vld [vmem:[%s223 + $0xe8] sm:$0x3]
  %v254 = vld [vmem:[%s223 + $0xf0] sm:$0xff]
  %v255 = vld [vmem:[%s223 + $0xf8] sm:$0xff]
  %v256 = vld [vmem:[%s223 + $0x100] sm:$0x3]
  %v257 = vld [vmem:[%s223 + $0x108] sm:$0xff]
  %v258 = vld [vmem:[%s223 + $0x110] sm:$0xff]
  %v259 = vld [vmem:[%s223 + $0x118] sm:$0x3]
  %v260 = vld [vmem:[%s223 + $0x120] sm:$0xff]
  %v261 = vld [vmem:[%s223 + $0x128] sm:$0xff]
  %v262 = vld [vmem:[%s223 + $0x130] sm:$0x3]
  %v263 = vld [vmem:[%s223 + $0x138] sm:$0xff]
  %v264 = vld [vmem:[%s223 + $0x140] sm:$0xff]
  %v265 = vld [vmem:[%s223 + $0x148] sm:$0x3]
  %v266 = vld [vmem:[%s223 + $0x150] sm:$0xff]
  %v267 = vld [vmem:[%s223 + $0x158] sm:$0xff]
  %v268 = vld [vmem:[%s223 + $0x160] sm:$0x3]
  %v269 = vld [vmem:[%s223 + $0x168] sm:$0xff]
  %v270 = vld [vmem:[%s223 + $0x170] sm:$0xff]
  %v271 = vld [vmem:[%s223 + $0x178] sm:$0x3]
  %v272 = vadd.f32 %v175, %v224
  %v273 = vadd.f32 %v176, %v225
  %v274 = vadd.f32 %v177, %v226
  %v275 = vadd.f32 %v178, %v227
  %v276 = vadd.f32 %v179, %v228
  %v277 = vadd.f32 %v180, %v229
  %v278 = vadd.f32 %v181, %v230
  %v279 = vadd.f32 %v182, %v231
  %v280 = vadd.f32 %v183, %v232
  %v281 = vadd.f32 %v184, %v233
  %v282 = vadd.f32 %v185, %v234
  %v283 = vadd.f32 %v186, %v235
  %v284 = vadd.f32 %v187, %v236
  %v285 = vadd.f32 %v188, %v237
  %v286 = vadd.f32 %v189, %v238
  %v287 = vadd.f32 %v190, %v239
  %v288 = vadd.f32 %v191, %v240
  %v289 = vadd.f32 %v192, %v241
  %v290 = vadd.f32 %v193, %v242
  %v291 = vadd.f32 %v194, %v243
  %v292 = vadd.f32 %v195, %v244
  %v293 = vadd.f32 %v196, %v245
  %v294 = vadd.f32 %v197, %v246
  %v295 = vadd.f32 %v198, %v247
  %v296 = vadd.f32 %v199, %v248
  %v297 = vadd.f32 %v200, %v249
  %v298 = vadd.f32 %v201, %v250
  %v299 = vadd.f32 %v202, %v251
  %v300 = vadd.f32 %v203, %v252
  %v301 = vadd.f32 %v204, %v253
  %v302 = vadd.f32 %v205, %v254
  %v303 = vadd.f32 %v206, %v255
  %v304 = vadd.f32 %v207, %v256
  %v305 = vadd.f32 %v208, %v257
  %v306 = vadd.f32 %v209, %v258
  %v307 = vadd.f32 %v210, %v259
  %v308 = vadd.f32 %v211, %v260
  %v309 = vadd.f32 %v212, %v261
  %v310 = vadd.f32 %v213, %v262
  %v311 = vadd.f32 %v214, %v263
  %v312 = vadd.f32 %v215, %v264
  %v313 = vadd.f32 %v216, %v265
  %v314 = vadd.f32 %v217, %v266
  %v315 = vadd.f32 %v218, %v267
  %v316 = vadd.f32 %v219, %v268
  %v317 = vadd.f32 %v220, %v269
  %v318 = vadd.f32 %v221, %v270
  %v319 = vadd.f32 %v222, %v271
  %v320 = vmul.f32 %v272, 0.5
  %v321 = vmul.f32 %v273, 0.5
  %v322 = vmul.f32 %v274, 0.5
  %v323 = vmul.f32 %v275, 0.5
  %v324 = vmul.f32 %v276, 0.5
  %v325 = vmul.f32 %v277, 0.5
  %v326 = vmul.f32 %v278, 0.5
  %v327 = vmul.f32 %v279, 0.5
  %v328 = vmul.f32 %v280, 0.5
  %v329 = vmul.f32 %v281, 0.5
  %v330 = vmul.f32 %v282, 0.5
  %v331 = vmul.f32 %v283, 0.5
  %v332 = vmul.f32 %v284, 0.5
  %v333 = vmul.f32 %v285, 0.5
  %v334 = vmul.f32 %v286, 0.5
  %v335 = vmul.f32 %v287, 0.5
  %v336 = vmul.f32 %v288, 0.5
  %v337 = vmul.f32 %v289, 0.5
  %v338 = vmul.f32 %v290, 0.5
  %v339 = vmul.f32 %v291, 0.5
  %v340 = vmul.f32 %v292, 0.5
  %v341 = vmul.f32 %v293, 0.5
  %v342 = vmul.f32 %v294, 0.5
  %v343 = vmul.f32 %v295, 0.5
  %v344 = vmul.f32 %v296, 0.5
  %v345 = vmul.f32 %v297, 0.5
  %v346 = vmul.f32 %v298, 0.5
  %v347 = vmul.f32 %v299, 0.5
  %v348 = vmul.f32 %v300, 0.5
  %v349 = vmul.f32 %v301, 0.5
  %v350 = vmul.f32 %v302, 0.5
  %v351 = vmul.f32 %v303, 0.5
  %v352 = vmul.f32 %v304, 0.5
  %v353 = vmul.f32 %v305, 0.5
  %v354 = vmul.f32 %v306, 0.5
  %v355 = vmul.f32 %v307, 0.5
  %v356 = vmul.f32 %v308, 0.5
  %v357 = vmul.f32 %v309, 0.5
  %v358 = vmul.f32 %v310, 0.5
  %v359 = vmul.f32 %v311, 0.5
  %v360 = vmul.f32 %v312, 0.5
  %v361 = vmul.f32 %v313, 0.5
  %v362 = vmul.f32 %v314, 0.5
  %v363 = vmul.f32 %v315, 0.5
  %v364 = vmul.f32 %v316, 0.5
  %v365 = vmul.f32 %v317, 0.5
  %v366 = vmul.f32 %v318, 0.5
  %v367 = vmul.f32 %v319, 0.5
  %v368 = vadd.f32 %v127, %v320
  %v369 = vadd.f32 %v128, %v321
  %v370 = vadd.f32 %v129, %v322
  %v371 = vadd.f32 %v130, %v323
  %v372 = vadd.f32 %v131, %v324
  %v373 = vadd.f32 %v132, %v325
  %v374 = vadd.f32 %v133, %v326
  %v375 = vadd.f32 %v134, %v327
  %v376 = vadd.f32 %v135, %v328
  %v377 = vadd.f32 %v136, %v329
  %v378 = vadd.f32 %v137, %v330
  %v379 = vadd.f32 %v138, %v331
  %v380 = vadd.f32 %v139, %v332
  %v381 = vadd.f32 %v140, %v333
  %v382 = vadd.f32 %v141, %v334
  %v383 = vadd.f32 %v142, %v335
  %v384 = vadd.f32 %v143, %v336
  %v385 = vadd.f32 %v144, %v337
  %v386 = vadd.f32 %v145, %v338
  %v387 = vadd.f32 %v146, %v339
  %v388 = vadd.f32 %v147, %v340
  %v389 = vadd.f32 %v148, %v341
  %v390 = vadd.f32 %v149, %v342
  %v391 = vadd.f32 %v150, %v343
  %v392 = vadd.f32 %v151, %v344
  %v393 = vadd.f32 %v152, %v345
  %v394 = vadd.f32 %v153, %v346
  %v395 = vadd.f32 %v154, %v347
  %v396 = vadd.f32 %v155, %v348
  %v397 = vadd.f32 %v156, %v349
  %v398 = vadd.f32 %v157, %v350
  %v399 = vadd.f32 %v158, %v351
  %v400 = vadd.f32 %v159, %v352
  %v401 = vadd.f32 %v160, %v353
  %v402 = vadd.f32 %v161, %v354
  %v403 = vadd.f32 %v162, %v355
  %v404 = vadd.f32 %v163, %v356
  %v405 = vadd.f32 %v164, %v357
  %v406 = vadd.f32 %v165, %v358
  %v407 = vadd.f32 %v166, %v359
  %v408 = vadd.f32 %v167, %v360
  %v409 = vadd.f32 %v168, %v361
  %v410 = vadd.f32 %v169, %v362
  %v411 = vadd.f32 %v170, %v363
  %v412 = vadd.f32 %v171, %v364
  %v413 = vadd.f32 %v172, %v365
  %v414 = vadd.f32 %v173, %v366
  %v415 = vadd.f32 %v174, %v367
  %vm448 = vcmask 1041408
  %v449 = vrot.slane %v368, 6
  %v450 = vrot.slane %v369, 6
  %v451 = vsel %vm448, %v449, %v450
  %v452 = vrot.slane %v371, 6
  %v453 = vrot.slane %v372, 6
  %v454 = vsel %vm448, %v452, %v453
  %v455 = vrot.slane %v374, 6
  %v456 = vrot.slane %v375, 6
  %v457 = vsel %vm448, %v455, %v456
  %v458 = vrot.slane %v377, 6
  %v459 = vrot.slane %v378, 6
  %v460 = vsel %vm448, %v458, %v459
  %v461 = vrot.slane %v380, 6
  %v462 = vrot.slane %v381, 6
  %v463 = vsel %vm448, %v461, %v462
  %v464 = vrot.slane %v383, 6
  %v465 = vrot.slane %v384, 6
  %v466 = vsel %vm448, %v464, %v465
  %v467 = vrot.slane %v386, 6
  %v468 = vrot.slane %v387, 6
  %v469 = vsel %vm448, %v467, %v468
  %v470 = vrot.slane %v389, 6
  %v471 = vrot.slane %v390, 6
  %v472 = vsel %vm448, %v470, %v471
  %v473 = vrot.slane %v392, 6
  %v474 = vrot.slane %v393, 6
  %v475 = vsel %vm448, %v473, %v474
  %v476 = vrot.slane %v395, 6
  %v477 = vrot.slane %v396, 6
  %v478 = vsel %vm448, %v476, %v477
  %v479 = vrot.slane %v398, 6
  %v480 = vrot.slane %v399, 6
  %v481 = vsel %vm448, %v479, %v480
  %v482 = vrot.slane %v401, 6
  %v483 = vrot.slane %v402, 6
  %v484 = vsel %vm448, %v482, %v483
  %v485 = vrot.slane %v404, 6
  %v486 = vrot.slane %v405, 6
  %v487 = vsel %vm448, %v485, %v486
  %v488 = vrot.slane %v407, 6
  %v489 = vrot.slane %v408, 6
  %v490 = vsel %vm448, %v488, %v489
  %v491 = vrot.slane %v410, 6
  %v492 = vrot.slane %v411, 6
  %v493 = vsel %vm448, %v491, %v492
  %v494 = vrot.slane %v413, 6
  %v495 = vrot.slane %v414, 6
  %v496 = vsel %vm448, %v494, %v495
  %v545 = vsub.f32 %v368, %v449
  %v546 = vsub.f32 %v369, %v451
  %v547 = vsub.f32 %v370, %v450
  %v548 = vsub.f32 %v371, %v452
  %v549 = vsub.f32 %v372, %v454
  %v550 = vsub.f32 %v373, %v453
  %v551 = vsub.f32 %v374, %v455
  %v552 = vsub.f32 %v375, %v457
  %v553 = vsub.f32 %v376, %v456
  %v554 = vsub.f32 %v377, %v458
  %v555 = vsub.f32 %v378, %v460
  %v556 = vsub.f32 %v379, %v459
  %v557 = vsub.f32 %v380, %v461
  %v558 = vsub.f32 %v381, %v463
  %v559 = vsub.f32 %v382, %v462
  %v560 = vsub.f32 %v383, %v464
  %v561 = vsub.f32 %v384, %v466
  %v562 = vsub.f32 %v385, %v465
  %v563 = vsub.f32 %v386, %v467
  %v564 = vsub.f32 %v387, %v469
  %v565 = vsub.f32 %v388, %v468
  %v566 = vsub.f32 %v389, %v470
  %v567 = vsub.f32 %v390, %v472
  %v568 = vsub.f32 %v391, %v471
  %v569 = vsub.f32 %v392, %v473
  %v570 = vsub.f32 %v393, %v475
  %v571 = vsub.f32 %v394, %v474
  %v572 = vsub.f32 %v395, %v476
  %v573 = vsub.f32 %v396, %v478
  %v574 = vsub.f32 %v397, %v477
  %v575 = vsub.f32 %v398, %v479
  %v576 = vsub.f32 %v399, %v481
  %v577 = vsub.f32 %v400, %v480
  %v578 = vsub.f32 %v401, %v482
  %v579 = vsub.f32 %v402, %v484
  %v580 = vsub.f32 %v403, %v483
  %v581 = vsub.f32 %v404, %v485
  %v582 = vsub.f32 %v405, %v487
  %v583 = vsub.f32 %v406, %v486
  %v584 = vsub.f32 %v407, %v488
  %v585 = vsub.f32 %v408, %v490
  %v586 = vsub.f32 %v409, %v489
  %v587 = vsub.f32 %v410, %v491
  %v588 = vsub.f32 %v411, %v493
  %v589 = vsub.f32 %v412, %v492
  %v590 = vsub.f32 %v413, %v494
  %v591 = vsub.f32 %v414, %v496
  %v592 = vsub.f32 %v415, %v495
  %v593 = vld [vmem:[#allocation2 + $0x1] sm:$0xff]
  %v594 = vld [vmem:[#allocation2 + $0x9] sm:$0xff]
  %v595 = vld [vmem:[#allocation2 + $0x19] sm:$0xff]
  %v596 = vld [vmem:[#allocation2 + $0x21] sm:$0xff]
  %v597 = vld [vmem:[#allocation2 + $0x31] sm:$0xff]
  %v598 = vld [vmem:[#allocation2 + $0x39] sm:$0xff]
  %v599 = vld [vmem:[#allocation2 + $0x49] sm:$0xff]
  %v600 = vld [vmem:[#allocation2 + $0x51] sm:$0xff]
  %v601 = vld [vmem:[#allocation2 + $0x61] sm:$0xff]
  %v602 = vld [vmem:[#allocation2 + $0x69] sm:$0xff]
  %v603 = vld [vmem:[#allocation2 + $0x79] sm:$0xff]
  %v604 = vld [vmem:[#allocation2 + $0x81] sm:$0xff]
  %v605 = vld [vmem:[#allocation2 + $0x91] sm:$0xff]
  %v606 = vld [vmem:[#allocation2 + $0x99] sm:$0xff]
  %v607 = vld [vmem:[#allocation2 + $0xa9] sm:$0xff]
  %v608 = vld [vmem:[#allocation2 + $0xb1] sm:$0xff]
  %v609 = vld [vmem:[#allocation2 + $0xc1] sm:$0xff]
  %v610 = vld [vmem:[#allocation2 + $0xc9] sm:$0xff]
  %v611 = vld [vmem:[#allocation2 + $0xd9] sm:$0xff]
  %v612 = vld [vmem:[#allocation2 + $0xe1] sm:$0xff]
  %v613 = vld [vmem:[#allocation2 + $0xf1] sm:$0xff]
  %v614 = vld [vmem:[#allocation2 + $0xf9] sm:$0xff]
  %v615 = vld [vmem:[#allocation2 + $0x109] sm:$0xff]
  %v616 = vld [vmem:[#allocation2 + $0x111] sm:$0xff]
  %v617 = vld [vmem:[#allocation2 + $0x121] sm:$0xff]
  %v618 = vld [vmem:[#allocation2 + $0x129] sm:$0xff]
  %v619 = vld [vmem:[#allocation2 + $0x139] sm:$0xff]
  %v620 = vld [vmem:[#allocation2 + $0x141] sm:$0xff]
  %v621 = vld [vmem:[#allocation2 + $0x151] sm:$0xff]
  %v622 = vld [vmem:[#allocation2 + $0x159] sm:$0xff]
  %v623 = vld [vmem:[#allocation2 + $0x169] sm:$0xff]
  %v624 = vld [vmem:[#allocation2 + $0x171] sm:$0xff]
  %v625 = vld [vmem:[#allocation2 + $0x181] sm:$0xff]
  %v626 = vld [vmem:[#allocation2 + $0x189] sm:$0xff]
  %v627 = vld [vmem:[#allocation2 + $0x199] sm:$0xff]
  %v628 = vld [vmem:[#allocation2 + $0x1a1] sm:$0xff]
  %v629 = vld [vmem:[#allocation2 + $0x180] sm:$0xff]
  %v630 = vld [vmem:[#allocation2 + $0x188] sm:$0xff]
  %v631 = vld [vmem:[#allocation2 + $0x198] sm:$0xff]
  %v632 = vld [vmem:[#allocation2 + $0x1a0] sm:$0xff]
  %v633 = vld [vmem:[#allocation2 + $0x2] sm:$0xff]
  %v634 = vld [vmem:[#allocation2 + $0xa] sm:$0xff]
  %v635 = vld [vmem:[#allocation2 + $0x1a] sm:$0xff]
  %v636 = vld [vmem:[#allocation2 + $0x22] sm:$0xff]
  %v637 = vld [vmem:[#allocation2 + $0x32] sm:$0xff]
  %v638 = vld [vmem:[#allocation2 + $0x3a] sm:$0xff]
  %v639 = vld [vmem:[#allocation2 + $0x4a] sm:$0xff]
  %v640 = vld [vmem:[#allocation2 + $0x52] sm:$0xff]
  %v641 = vld [vmem:[#allocation2 + $0x62] sm:$0xff]
  %v642 = vld [vmem:[#allocation2 + $0x6a] sm:$0xff]
  %v643 = vld [vmem:[#allocation2 + $0x7a] sm:$0xff]
  %v644 = vld [vmem:[#allocation2 + $0x82] sm:$0xff]
  %v645 = vld [vmem:[#allocation2 + $0x92] sm:$0xff]
  %v646 = vld [vmem:[#allocation2 + $0x9a] sm:$0xff]
  %v647 = vld [vmem:[#allocation2 + $0xaa] sm:$0xff]
  %v648 = vld [vmem:[#allocation2 + $0xb2] sm:$0xff]
  %v649 = vld [vmem:[#allocation2 + $0xc2] sm:$0xff]
  %v650 = vld [vmem:[#allocation2 + $0xca] sm:$0xff]
  %v651 = vld [vmem:[#allocation2 + $0xda] sm:$0xff]
  %v652 = vld [vmem:[#allocation2 + $0xe2] sm:$0xff]
  %v653 = vld [vmem:[#allocation2 + $0xf2] sm:$0xff]
  %v654 = vld [vmem:[#allocation2 + $0xfa] sm:$0xff]
  %v655 = vld [vmem:[#allocation2 + $0x10a] sm:$0xff]
  %v656 = vld [vmem:[#allocation2 + $0x112] sm:$0xff]
  %v657 = vld [vmem:[#allocation2 + $0x122] sm:$0xff]
  %v658 = vld [vmem:[#allocation2 + $0x12a] sm:$0xff]
  %v659 = vld [vmem:[#allocation2 + $0x13a] sm:$0xff]
  %v660 = vld [vmem:[#allocation2 + $0x142] sm:$0xff]
  %v661 = vld [vmem:[#allocation2 + $0x152] sm:$0xff]
  %v662 = vld [vmem:[#allocation2 + $0x15a] sm:$0xff]
  %v663 = vld [vmem:[#allocation2 + $0x16a] sm:$0xff]
  %v664 = vld [vmem:[#allocation2 + $0x172] sm:$0xff]
  %v665 = vld [vmem:[#allocation2 + $0x182] sm:$0xff]
  %v666 = vld [vmem:[#allocation2 + $0x18a] sm:$0xff]
  %v667 = vld [vmem:[#allocation2 + $0x19a] sm:$0xff]
  %v668 = vld [vmem:[#allocation2 + $0x1a2] sm:$0xff]
  %v669 = vadd.f32 %v175, %v633
  %v670 = vadd.f32 %v176, %v634
  %v671 = vadd.f32 %v178, %v635
  %v672 = vadd.f32 %v179, %v636
  %v673 = vadd.f32 %v181, %v637
  %v674 = vadd.f32 %v182, %v638
  %v675 = vadd.f32 %v184, %v639
  %v676 = vadd.f32 %v185, %v640
  %v677 = vadd.f32 %v187, %v641
  %v678 = vadd.f32 %v188, %v642
  %v679 = vadd.f32 %v190, %v643
  %v680 = vadd.f32 %v191, %v644
  %v681 = vadd.f32 %v193, %v645
  %v682 = vadd.f32 %v194, %v646
  %v683 = vadd.f32 %v196, %v647
  %v684 = vadd.f32 %v197, %v648
  %v685 = vadd.f32 %v199, %v649
  %v686 = vadd.f32 %v200, %v650
  %v687 = vadd.f32 %v202, %v651
  %v688 = vadd.f32 %v203, %v652
  %v689 = vadd.f32 %v205, %v653
  %v690 = vadd.f32 %v206, %v654
  %v691 = vadd.f32 %v208, %v655
  %v692 = vadd.f32 %v209, %v656
  %v693 = vadd.f32 %v211, %v657
  %v694 = vadd.f32 %v212, %v658
  %v695 = vadd.f32 %v214, %v659
  %v696 = vadd.f32 %v215, %v660
  %v697 = vadd.f32 %v217, %v661
  %v698 = vadd.f32 %v218, %v662
  %v699 = vadd.f32 %v220, %v663
  %v700 = vadd.f32 %v221, %v664
  %v701 = vadd.f32 %v629, %v665
  %v702 = vadd.f32 %v630, %v666
  %v703 = vadd.f32 %v631, %v667
  %v704 = vadd.f32 %v632, %v668
  %v705 = vmul.f32 %v669, 0.5
  %v706 = vmul.f32 %v670, 0.5
  %v707 = vmul.f32 %v671, 0.5
  %v708 = vmul.f32 %v672, 0.5
  %v709 = vmul.f32 %v673, 0.5
  %v710 = vmul.f32 %v674, 0.5
  %v711 = vmul.f32 %v675, 0.5
  %v712 = vmul.f32 %v676, 0.5
  %v713 = vmul.f32 %v677, 0.5
  %v714 = vmul.f32 %v678, 0.5
  %v715 = vmul.f32 %v679, 0.5
  %v716 = vmul.f32 %v680, 0.5
  %v717 = vmul.f32 %v681, 0.5
  %v718 = vmul.f32 %v682, 0.5
  %v719 = vmul.f32 %v683, 0.5
  %v720 = vmul.f32 %v684, 0.5
  %v721 = vmul.f32 %v685, 0.5
  %v722 = vmul.f32 %v686, 0.5
  %v723 = vmul.f32 %v687, 0.5
  %v724 = vmul.f32 %v688, 0.5
  %v725 = vmul.f32 %v689, 0.5
  %v726 = vmul.f32 %v690, 0.5
  %v727 = vmul.f32 %v691, 0.5
  %v728 = vmul.f32 %v692, 0.5
  %v729 = vmul.f32 %v693, 0.5
  %v730 = vmul.f32 %v694, 0.5
  %v731 = vmul.f32 %v695, 0.5
  %v732 = vmul.f32 %v696, 0.5
  %v733 = vmul.f32 %v697, 0.5
  %v734 = vmul.f32 %v698, 0.5
  %v735 = vmul.f32 %v699, 0.5
  %v736 = vmul.f32 %v700, 0.5
  %v737 = vmul.f32 %v701, 0.5
  %v738 = vmul.f32 %v702, 0.5
  %v739 = vmul.f32 %v703, 0.5
  %v740 = vmul.f32 %v704, 0.5
  %v741 = vadd.f32 %v593, %v705
  %v742 = vadd.f32 %v594, %v706
  %v743 = vadd.f32 %v595, %v707
  %v744 = vadd.f32 %v596, %v708
  %v745 = vadd.f32 %v597, %v709
  %v746 = vadd.f32 %v598, %v710
  %v747 = vadd.f32 %v599, %v711
  %v748 = vadd.f32 %v600, %v712
  %v749 = vadd.f32 %v601, %v713
  %v750 = vadd.f32 %v602, %v714
  %v751 = vadd.f32 %v603, %v715
  %v752 = vadd.f32 %v604, %v716
  %v753 = vadd.f32 %v605, %v717
  %v754 = vadd.f32 %v606, %v718
  %v755 = vadd.f32 %v607, %v719
  %v756 = vadd.f32 %v608, %v720
  %v757 = vadd.f32 %v609, %v721
  %v758 = vadd.f32 %v610, %v722
  %v759 = vadd.f32 %v611, %v723
  %v760 = vadd.f32 %v612, %v724
  %v761 = vadd.f32 %v613, %v725
  %v762 = vadd.f32 %v614, %v726
  %v763 = vadd.f32 %v615, %v727
  %v764 = vadd.f32 %v616, %v728
  %v765 = vadd.f32 %v617, %v729
  %v766 = vadd.f32 %v618, %v730
  %v767 = vadd.f32 %v619, %v731
  %v768 = vadd.f32 %v620, %v732
  %v769 = vadd.f32 %v621, %v733
  %v770 = vadd.f32 %v622, %v734
  %v771 = vadd.f32 %v623, %v735
  %v772 = vadd.f32 %v624, %v736
  %v773 = vadd.f32 %v625, %v737
  %v774 = vadd.f32 %v626, %v738
  %v775 = vadd.f32 %v627, %v739
  %v776 = vadd.f32 %v628, %v740
  %v777 = vsub.f32 %v745, %v741
  %v778 = vsub.f32 %v746, %v742
  %v779 = vsub.f32 %v747, %v743
  %v780 = vsub.f32 %v748, %v744
  %v781 = vsub.f32 %v749, %v745
  %v782 = vsub.f32 %v750, %v746
  %v783 = vsub.f32 %v751, %v747
  %v784 = vsub.f32 %v752, %v748
  %v785 = vsub.f32 %v753, %v749
  %v786 = vsub.f32 %v754, %v750
  %v787 = vsub.f32 %v755, %v751
  %v788 = vsub.f32 %v756, %v752
  %v789 = vsub.f32 %v757, %v753
  %v790 = vsub.f32 %v758, %v754
  %v791 = vsub.f32 %v759, %v755
  %v792 = vsub.f32 %v760, %v756
  %v793 = vsub.f32 %v761, %v757
  %v794 = vsub.f32 %v762, %v758
  %v795 = vsub.f32 %v763, %v759
  %v796 = vsub.f32 %v764, %v760
  %v797 = vsub.f32 %v765, %v761
  %v798 = vsub.f32 %v766, %v762
  %v799 = vsub.f32 %v767, %v763
  %v800 = vsub.f32 %v768, %v764
  %v801 = vsub.f32 %v769, %v765
  %v802 = vsub.f32 %v770, %v766
  %v803 = vsub.f32 %v771, %v767
  %v804 = vsub.f32 %v772, %v768
  %v805 = vsub.f32 %v773, %v769
  %v806 = vsub.f32 %v774, %v770
  %v807 = vsub.f32 %v775, %v771
  %v808 = vsub.f32 %v776, %v772
  %v809 = vmul.f32 %v545, %v545
  %v810 = vmul.f32 %v546, %v546
  %v811 = vmul.f32 %v547, %v547
  %v812 = vmul.f32 %v548, %v548
  %v813 = vmul.f32 %v549, %v549
  %v814 = vmul.f32 %v550, %v550
  %v815 = vmul.f32 %v551, %v551
  %v816 = vmul.f32 %v552, %v552
  %v817 = vmul.f32 %v553, %v553
  %v818 = vmul.f32 %v554, %v554
  %v819 = vmul.f32 %v555, %v555
  %v820 = vmul.f32 %v556, %v556
  %v821 = vmul.f32 %v557, %v557
  %v822 = vmul.f32 %v558, %v558
  %v823 = vmul.f32 %v559, %v559
  %v824 = vmul.f32 %v560, %v560
  %v825 = vmul.f32 %v561, %v561
  %v826 = vmul.f32 %v562, %v562
  %v827 = vmul.f32 %v563, %v563
  %v828 = vmul.f32 %v564, %v564
  %v829 = vmul.f32 %v565, %v565
  %v830 = vmul.f32 %v566, %v566
  %v831 = vmul.f32 %v567, %v567
  %v832 = vmul.f32 %v568, %v568
  %v833 = vmul.f32 %v569, %v569
  %v834 = vmul.f32 %v570, %v570
  %v835 = vmul.f32 %v571, %v571
  %v836 = vmul.f32 %v572, %v572
  %v837 = vmul.f32 %v573, %v573
  %v838 = vmul.f32 %v574, %v574
  %v839 = vmul.f32 %v575, %v575
  %v840 = vmul.f32 %v576, %v576
  %v841 = vmul.f32 %v577, %v577
  %v842 = vmul.f32 %v578, %v578
  %v843 = vmul.f32 %v579, %v579
  %v844 = vmul.f32 %v580, %v580
  %v845 = vmul.f32 %v581, %v581
  %v846 = vmul.f32 %v582, %v582
  %v847 = vmul.f32 %v583, %v583
  %v848 = vmul.f32 %v584, %v584
  %v849 = vmul.f32 %v585, %v585
  %v850 = vmul.f32 %v586, %v586
  %v851 = vmul.f32 %v587, %v587
  %v852 = vmul.f32 %v588, %v588
  %v853 = vmul.f32 %v589, %v589
  %v854 = vmul.f32 %v590, %v590
  %v855 = vmul.f32 %v591, %v591
  %v856 = vmul.f32 %v592, %v592
  %v857 = vmul.f32 %v777, %v777
  %v858 = vmul.f32 %v778, %v778
  %v859 = vmul.f32 %v779, %v779
  %v860 = vmul.f32 %v780, %v780
  %v861 = vmul.f32 %v781, %v781
  %v862 = vmul.f32 %v782, %v782
  %v863 = vmul.f32 %v783, %v783
  %v864 = vmul.f32 %v784, %v784
  %v865 = vmul.f32 %v785, %v785
  %v866 = vmul.f32 %v786, %v786
  %v867 = vmul.f32 %v787, %v787
  %v868 = vmul.f32 %v788, %v788
  %v869 = vmul.f32 %v789, %v789
  %v870 = vmul.f32 %v790, %v790
  %v871 = vmul.f32 %v791, %v791
  %v872 = vmul.f32 %v792, %v792
  %v873 = vmul.f32 %v793, %v793
  %v874 = vmul.f32 %v794, %v794
  %v875 = vmul.f32 %v795, %v795
  %v876 = vmul.f32 %v796, %v796
  %v877 = vmul.f32 %v797, %v797
  %v878 = vmul.f32 %v798, %v798
  %v879 = vmul.f32 %v799, %v799
  %v880 = vmul.f32 %v800, %v800
  %v881 = vmul.f32 %v801, %v801
  %v882 = vmul.f32 %v802, %v802
  %v883 = vmul.f32 %v803, %v803
  %v884 = vmul.f32 %v804, %v804
  %v885 = vmul.f32 %v805, %v805
  %v886 = vmul.f32 %v806, %v806
  %v887 = vmul.f32 %v807, %v807
  %v888 = vmul.f32 %v808, %v808
  %v921 = vrot.slane %v857, 6
  %v922 = vrot.slane %v858, 6
  %v923 = vsel %vm448, %v921, %v922
  %v924 = vrot.slane %v859, 6
  %v925 = vrot.slane %v860, 6
  %v926 = vsel %vm448, %v924, %v925
  %v927 = vrot.slane %v861, 6
  %v928 = vrot.slane %v862, 6
  %v929 = vsel %vm448, %v927, %v928
  %v930 = vrot.slane %v863, 6
  %v931 = vrot.slane %v864, 6
  %v932 = vsel %vm448, %v930, %v931
  %v933 = vrot.slane %v865, 6
  %v934 = vrot.slane %v866, 6
  %v935 = vsel %vm448, %v933, %v934
  %v936 = vrot.slane %v867, 6
  %v937 = vrot.slane %v868, 6
  %v938 = vsel %vm448, %v936, %v937
  %v939 = vrot.slane %v869, 6
  %v940 = vrot.slane %v870, 6
  %v941 = vsel %vm448, %v939, %v940
  %v942 = vrot.slane %v871, 6
  %v943 = vrot.slane %v872, 6
  %v944 = vsel %vm448, %v942, %v943
  %v945 = vrot.slane %v873, 6
  %v946 = vrot.slane %v874, 6
  %v947 = vsel %vm448, %v945, %v946
  %v948 = vrot.slane %v875, 6
  %v949 = vrot.slane %v876, 6
  %v950 = vsel %vm448, %v948, %v949
  %v951 = vrot.slane %v877, 6
  %v952 = vrot.slane %v878, 6
  %v953 = vsel %vm448, %v951, %v952
  %v954 = vrot.slane %v879, 6
  %v955 = vrot.slane %v880, 6
  %v956 = vsel %vm448, %v954, %v955
  %v957 = vrot.slane %v881, 6
  %v958 = vrot.slane %v882, 6
  %v959 = vsel %vm448, %v957, %v958
  %v960 = vrot.slane %v883, 6
  %v961 = vrot.slane %v884, 6
  %v962 = vsel %vm448, %v960, %v961
  %v963 = vrot.slane %v885, 6
  %v964 = vrot.slane %v886, 6
  %v965 = vsel %vm448, %v963, %v964
  %v966 = vrot.slane %v887, 6
  %v967 = vrot.slane %v888, 6
  %v968 = vsel %vm448, %v966, %v967
  %v1017 = vadd.f32 %v809, %v921
  %v1018 = vadd.f32 %v810, %v923
  %v1019 = vadd.f32 %v811, %v922
  %v1020 = vadd.f32 %v812, %v924
  %v1021 = vadd.f32 %v813, %v926
  %v1022 = vadd.f32 %v814, %v925
  %v1023 = vadd.f32 %v815, %v927
  %v1024 = vadd.f32 %v816, %v929
  %v1025 = vadd.f32 %v817, %v928
  %v1026 = vadd.f32 %v818, %v930
  %v1027 = vadd.f32 %v819, %v932
  %v1028 = vadd.f32 %v820, %v931
  %v1029 = vadd.f32 %v821, %v933
  %v1030 = vadd.f32 %v822, %v935
  %v1031 = vadd.f32 %v823, %v934
  %v1032 = vadd.f32 %v824, %v936
  %v1033 = vadd.f32 %v825, %v938
  %v1034 = vadd.f32 %v826, %v937
  %v1035 = vadd.f32 %v827, %v939
  %v1036 = vadd.f32 %v828, %v941
  %v1037 = vadd.f32 %v829, %v940
  %v1038 = vadd.f32 %v830, %v942
  %v1039 = vadd.f32 %v831, %v944
  %v1040 = vadd.f32 %v832, %v943
  %v1041 = vadd.f32 %v833, %v945
  %v1042 = vadd.f32 %v834, %v947
  %v1043 = vadd.f32 %v835, %v946
  %v1044 = vadd.f32 %v836, %v948
  %v1045 = vadd.f32 %v837, %v950
  %v1046 = vadd.f32 %v838, %v949
  %v1047 = vadd.f32 %v839, %v951
  %v1048 = vadd.f32 %v840, %v953
  %v1049 = vadd.f32 %v841, %v952
  %v1050 = vadd.f32 %v842, %v954
  %v1051 = vadd.f32 %v843, %v956
  %v1052 = vadd.f32 %v844, %v955
  %v1053 = vadd.f32 %v845, %v957
  %v1054 = vadd.f32 %v846, %v959
  %v1055 = vadd.f32 %v847, %v958
  %v1056 = vadd.f32 %v848, %v960
  %v1057 = vadd.f32 %v849, %v962
  %v1058 = vadd.f32 %v850, %v961
  %v1059 = vadd.f32 %v851, %v963
  %v1060 = vadd.f32 %v852, %v965
  %v1061 = vadd.f32 %v853, %v964
  %v1062 = vadd.f32 %v854, %v966
  %v1063 = vadd.f32 %v855, %v968
  %v1064 = vadd.f32 %v856, %v967
  %v1065 = vrsqrt.pop %v1017
  %v1066 = vmul.f32 %v1017, %v1065
  %vm1067 = vcmp.eq.f32.partialorder %v1017, inf
  %v1068 = vsel %vm1067, %v1017, %v1066
  %vm1069 = vcmp.eq.f32.partialorder %v1017, 0.0
  %v1070 = vand.u32 %v1017, 2147483648
  %v1071 = vsel %vm1069, %v1070, %v1068
  %v1072 = vrsqrt.pop %v1018
  %v1073 = vmul.f32 %v1018, %v1072
  %vm1074 = vcmp.eq.f32.partialorder %v1018, inf
  %v1075 = vsel %vm1074, %v1018, %v1073
  %vm1076 = vcmp.eq.f32.partialorder %v1018, 0.0
  %v1077 = vand.u32 %v1018, 2147483648
  %v1078 = vsel %vm1076, %v1077, %v1075
  %v1079 = vrsqrt.pop %v1019
  %v1080 = vmul.f32 %v1019, %v1079
  %vm1081 = vcmp.eq.f32.partialorder %v1019, inf
  %v1082 = vsel %vm1081, %v1019, %v1080
  %vm1083 = vcmp.eq.f32.partialorder %v1019, 0.0
  %v1084 = vand.u32 %v1019, 2147483648
  %v1085 = vsel %vm1083, %v1084, %v1082
  %v1086 = vrsqrt.pop %v1020
  %v1087 = vmul.f32 %v1020, %v1086
  %vm1088 = vcmp.eq.f32.partialorder %v1020, inf
  %v1089 = vsel %vm1088, %v1020, %v1087
  %vm1090 = vcmp.eq.f32.partialorder %v1020, 0.0
  %v1091 = vand.u32 %v1020, 2147483648
  %v1092 = vsel %vm1090, %v1091, %v1089
  %v1093 = vrsqrt.pop %v1021
  %v1094 = vmul.f32 %v1021, %v1093
  %vm1095 = vcmp.eq.f32.partialorder %v1021, inf
  %v1096 = vsel %vm1095, %v1021, %v1094
  %vm1097 = vcmp.eq.f32.partialorder %v1021, 0.0
  %v1098 = vand.u32 %v1021, 2147483648
  %v1099 = vsel %vm1097, %v1098, %v1096
  %v1100 = vrsqrt.pop %v1022
  %v1101 = vmul.f32 %v1022, %v1100
  %vm1102 = vcmp.eq.f32.partialorder %v1022, inf
  %v1103 = vsel %vm1102, %v1022, %v1101
  %vm1104 = vcmp.eq.f32.partialorder %v1022, 0.0
  %v1105 = vand.u32 %v1022, 2147483648
  %v1106 = vsel %vm1104, %v1105, %v1103
  %v1107 = vrsqrt.pop %v1023
  %v1108 = vmul.f32 %v1023, %v1107
  %vm1109 = vcmp.eq.f32.partialorder %v1023, inf
  %v1110 = vsel %vm1109, %v1023, %v1108
  %vm1111 = vcmp.eq.f32.partialorder %v1023, 0.0
  %v1112 = vand.u32 %v1023, 2147483648
  %v1113 = vsel %vm1111, %v1112, %v1110
  %v1114 = vrsqrt.pop %v1024
  %v1115 = vmul.f32 %v1024, %v1114
  %vm1116 = vcmp.eq.f32.partialorder %v1024, inf
  %v1117 = vsel %vm1116, %v1024, %v1115
  %vm1118 = vcmp.eq.f32.partialorder %v1024, 0.0
  %v1119 = vand.u32 %v1024, 2147483648
  %v1120 = vsel %vm1118, %v1119, %v1117
  %v1121 = vrsqrt.pop %v1025
  %v1122 = vmul.f32 %v1025, %v1121
  %vm1123 = vcmp.eq.f32.partialorder %v1025, inf
  %v1124 = vsel %vm1123, %v1025, %v1122
  %vm1125 = vcmp.eq.f32.partialorder %v1025, 0.0
  %v1126 = vand.u32 %v1025, 2147483648
  %v1127 = vsel %vm1125, %v1126, %v1124
  %v1128 = vrsqrt.pop %v1026
  %v1129 = vmul.f32 %v1026, %v1128
  %vm1130 = vcmp.eq.f32.partialorder %v1026, inf
  %v1131 = vsel %vm1130, %v1026, %v1129
  %vm1132 = vcmp.eq.f32.partialorder %v1026, 0.0
  %v1133 = vand.u32 %v1026, 2147483648
  %v1134 = vsel %vm1132, %v1133, %v1131
  %v1135 = vrsqrt.pop %v1027
  %v1136 = vmul.f32 %v1027, %v1135
  %vm1137 = vcmp.eq.f32.partialorder %v1027, inf
  %v1138 = vsel %vm1137, %v1027, %v1136
  %vm1139 = vcmp.eq.f32.partialorder %v1027, 0.0
  %v1140 = vand.u32 %v1027, 2147483648
  %v1141 = vsel %vm1139, %v1140, %v1138
  %v1142 = vrsqrt.pop %v1028
  %v1143 = vmul.f32 %v1028, %v1142
  %vm1144 = vcmp.eq.f32.partialorder %v1028, inf
  %v1145 = vsel %vm1144, %v1028, %v1143
  %vm1146 = vcmp.eq.f32.partialorder %v1028, 0.0
  %v1147 = vand.u32 %v1028, 2147483648
  %v1148 = vsel %vm1146, %v1147, %v1145
  %v1149 = vrsqrt.pop %v1029
  %v1150 = vmul.f32 %v1029, %v1149
  %vm1151 = vcmp.eq.f32.partialorder %v1029, inf
  %v1152 = vsel %vm1151, %v1029, %v1150
  %vm1153 = vcmp.eq.f32.partialorder %v1029, 0.0
  %v1154 = vand.u32 %v1029, 2147483648
  %v1155 = vsel %vm1153, %v1154, %v1152
  %v1156 = vrsqrt.pop %v1030
  %v1157 = vmul.f32 %v1030, %v1156
  %vm1158 = vcmp.eq.f32.partialorder %v1030, inf
  %v1159 = vsel %vm1158, %v1030, %v1157
  %vm1160 = vcmp.eq.f32.partialorder %v1030, 0.0
  %v1161 = vand.u32 %v1030, 2147483648
  %v1162 = vsel %vm1160, %v1161, %v1159
  %v1163 = vrsqrt.pop %v1031
  %v1164 = vmul.f32 %v1031, %v1163
  %vm1165 = vcmp.eq.f32.partialorder %v1031, inf
  %v1166 = vsel %vm1165, %v1031, %v1164
  %vm1167 = vcmp.eq.f32.partialorder %v1031, 0.0
  %v1168 = vand.u32 %v1031, 2147483648
  %v1169 = vsel %vm1167, %v1168, %v1166
  %v1170 = vrsqrt.pop %v1032
  %v1171 = vmul.f32 %v1032, %v1170
  %vm1172 = vcmp.eq.f32.partialorder %v1032, inf
  %v1173 = vsel %vm1172, %v1032, %v1171
  %vm1174 = vcmp.eq.f32.partialorder %v1032, 0.0
  %v1175 = vand.u32 %v1032, 2147483648
  %v1176 = vsel %vm1174, %v1175, %v1173
  %v1177 = vrsqrt.pop %v1033
  %v1178 = vmul.f32 %v1033, %v1177
  %vm1179 = vcmp.eq.f32.partialorder %v1033, inf
  %v1180 = vsel %vm1179, %v1033, %v1178
  %vm1181 = vcmp.eq.f32.partialorder %v1033, 0.0
  %v1182 = vand.u32 %v1033, 2147483648
  %v1183 = vsel %vm1181, %v1182, %v1180
  %v1184 = vrsqrt.pop %v1034
  %v1185 = vmul.f32 %v1034, %v1184
  %vm1186 = vcmp.eq.f32.partialorder %v1034, inf
  %v1187 = vsel %vm1186, %v1034, %v1185
  %vm1188 = vcmp.eq.f32.partialorder %v1034, 0.0
  %v1189 = vand.u32 %v1034, 2147483648
  %v1190 = vsel %vm1188, %v1189, %v1187
  %v1191 = vrsqrt.pop %v1035
  %v1192 = vmul.f32 %v1035, %v1191
  %vm1193 = vcmp.eq.f32.partialorder %v1035, inf
  %v1194 = vsel %vm1193, %v1035, %v1192
  %vm1195 = vcmp.eq.f32.partialorder %v1035, 0.0
  %v1196 = vand.u32 %v1035, 2147483648
  %v1197 = vsel %vm1195, %v1196, %v1194
  %v1198 = vrsqrt.pop %v1036
  %v1199 = vmul.f32 %v1036, %v1198
  %vm1200 = vcmp.eq.f32.partialorder %v1036, inf
  %v1201 = vsel %vm1200, %v1036, %v1199
  %vm1202 = vcmp.eq.f32.partialorder %v1036, 0.0
  %v1203 = vand.u32 %v1036, 2147483648
  %v1204 = vsel %vm1202, %v1203, %v1201
  %v1205 = vrsqrt.pop %v1037
  %v1206 = vmul.f32 %v1037, %v1205
  %vm1207 = vcmp.eq.f32.partialorder %v1037, inf
  %v1208 = vsel %vm1207, %v1037, %v1206
  %vm1209 = vcmp.eq.f32.partialorder %v1037, 0.0
  %v1210 = vand.u32 %v1037, 2147483648
  %v1211 = vsel %vm1209, %v1210, %v1208
  %v1212 = vrsqrt.pop %v1038
  %v1213 = vmul.f32 %v1038, %v1212
  %vm1214 = vcmp.eq.f32.partialorder %v1038, inf
  %v1215 = vsel %vm1214, %v1038, %v1213
  %vm1216 = vcmp.eq.f32.partialorder %v1038, 0.0
  %v1217 = vand.u32 %v1038, 2147483648
  %v1218 = vsel %vm1216, %v1217, %v1215
  %v1219 = vrsqrt.pop %v1039
  %v1220 = vmul.f32 %v1039, %v1219
  %vm1221 = vcmp.eq.f32.partialorder %v1039, inf
  %v1222 = vsel %vm1221, %v1039, %v1220
  %vm1223 = vcmp.eq.f32.partialorder %v1039, 0.0
  %v1224 = vand.u32 %v1039, 2147483648
  %v1225 = vsel %vm1223, %v1224, %v1222
  %v1226 = vrsqrt.pop %v1040
  %v1227 = vmul.f32 %v1040, %v1226
  %vm1228 = vcmp.eq.f32.partialorder %v1040, inf
  %v1229 = vsel %vm1228, %v1040, %v1227
  %vm1230 = vcmp.eq.f32.partialorder %v1040, 0.0
  %v1231 = vand.u32 %v1040, 2147483648
  %v1232 = vsel %vm1230, %v1231, %v1229
  %v1233 = vrsqrt.pop %v1041
  %v1234 = vmul.f32 %v1041, %v1233
  %vm1235 = vcmp.eq.f32.partialorder %v1041, inf
  %v1236 = vsel %vm1235, %v1041, %v1234
  %vm1237 = vcmp.eq.f32.partialorder %v1041, 0.0
  %v1238 = vand.u32 %v1041, 2147483648
  %v1239 = vsel %vm1237, %v1238, %v1236
  %v1240 = vrsqrt.pop %v1042
  %v1241 = vmul.f32 %v1042, %v1240
  %vm1242 = vcmp.eq.f32.partialorder %v1042, inf
  %v1243 = vsel %vm1242, %v1042, %v1241
  %vm1244 = vcmp.eq.f32.partialorder %v1042, 0.0
  %v1245 = vand.u32 %v1042, 2147483648
  %v1246 = vsel %vm1244, %v1245, %v1243
  %v1247 = vrsqrt.pop %v1043
  %v1248 = vmul.f32 %v1043, %v1247
  %vm1249 = vcmp.eq.f32.partialorder %v1043, inf
  %v1250 = vsel %vm1249, %v1043, %v1248
  %vm1251 = vcmp.eq.f32.partialorder %v1043, 0.0
  %v1252 = vand.u32 %v1043, 2147483648
  %v1253 = vsel %vm1251, %v1252, %v1250
  %v1254 = vrsqrt.pop %v1044
  %v1255 = vmul.f32 %v1044, %v1254
  %vm1256 = vcmp.eq.f32.partialorder %v1044, inf
  %v1257 = vsel %vm1256, %v1044, %v1255
  %vm1258 = vcmp.eq.f32.partialorder %v1044, 0.0
  %v1259 = vand.u32 %v1044, 2147483648
  %v1260 = vsel %vm1258, %v1259, %v1257
  %v1261 = vrsqrt.pop %v1045
  %v1262 = vmul.f32 %v1045, %v1261
  %vm1263 = vcmp.eq.f32.partialorder %v1045, inf
  %v1264 = vsel %vm1263, %v1045, %v1262
  %vm1265 = vcmp.eq.f32.partialorder %v1045, 0.0
  %v1266 = vand.u32 %v1045, 2147483648
  %v1267 = vsel %vm1265, %v1266, %v1264
  %v1268 = vrsqrt.pop %v1046
  %v1269 = vmul.f32 %v1046, %v1268
  %vm1270 = vcmp.eq.f32.partialorder %v1046, inf
  %v1271 = vsel %vm1270, %v1046, %v1269
  %vm1272 = vcmp.eq.f32.partialorder %v1046, 0.0
  %v1273 = vand.u32 %v1046, 2147483648
  %v1274 = vsel %vm1272, %v1273, %v1271
  %v1275 = vrsqrt.pop %v1047
  %v1276 = vmul.f32 %v1047, %v1275
  %vm1277 = vcmp.eq.f32.partialorder %v1047, inf
  %v1278 = vsel %vm1277, %v1047, %v1276
  %vm1279 = vcmp.eq.f32.partialorder %v1047, 0.0
  %v1280 = vand.u32 %v1047, 2147483648
  %v1281 = vsel %vm1279, %v1280, %v1278
  %v1282 = vrsqrt.pop %v1048
  %v1283 = vmul.f32 %v1048, %v1282
  %vm1284 = vcmp.eq.f32.partialorder %v1048, inf
  %v1285 = vsel %vm1284, %v1048, %v1283
  %vm1286 = vcmp.eq.f32.partialorder %v1048, 0.0
  %v1287 = vand.u32 %v1048, 2147483648
  %v1288 = vsel %vm1286, %v1287, %v1285
  %v1289 = vrsqrt.pop %v1049
  %v1290 = vmul.f32 %v1049, %v1289
  %vm1291 = vcmp.eq.f32.partialorder %v1049, inf
  %v1292 = vsel %vm1291, %v1049, %v1290
  %vm1293 = vcmp.eq.f32.partialorder %v1049, 0.0
  %v1294 = vand.u32 %v1049, 2147483648
  %v1295 = vsel %vm1293, %v1294, %v1292
  %v1296 = vrsqrt.pop %v1050
  %v1297 = vmul.f32 %v1050, %v1296
  %vm1298 = vcmp.eq.f32.partialorder %v1050, inf
  %v1299 = vsel %vm1298, %v1050, %v1297
  %vm1300 = vcmp.eq.f32.partialorder %v1050, 0.0
  %v1301 = vand.u32 %v1050, 2147483648
  %v1302 = vsel %vm1300, %v1301, %v1299
  %v1303 = vrsqrt.pop %v1051
  %v1304 = vmul.f32 %v1051, %v1303
  %vm1305 = vcmp.eq.f32.partialorder %v1051, inf
  %v1306 = vsel %vm1305, %v1051, %v1304
  %vm1307 = vcmp.eq.f32.partialorder %v1051, 0.0
  %v1308 = vand.u32 %v1051, 2147483648
  %v1309 = vsel %vm1307, %v1308, %v1306
  %v1310 = vrsqrt.pop %v1052
  %v1311 = vmul.f32 %v1052, %v1310
  %vm1312 = vcmp.eq.f32.partialorder %v1052, inf
  %v1313 = vsel %vm1312, %v1052, %v1311
  %vm1314 = vcmp.eq.f32.partialorder %v1052, 0.0
  %v1315 = vand.u32 %v1052, 2147483648
  %v1316 = vsel %vm1314, %v1315, %v1313
  %v1317 = vrsqrt.pop %v1053
  %v1318 = vmul.f32 %v1053, %v1317
  %vm1319 = vcmp.eq.f32.partialorder %v1053, inf
  %v1320 = vsel %vm1319, %v1053, %v1318
  %vm1321 = vcmp.eq.f32.partialorder %v1053, 0.0
  %v1322 = vand.u32 %v1053, 2147483648
  %v1323 = vsel %vm1321, %v1322, %v1320
  %v1324 = vrsqrt.pop %v1054
  %v1325 = vmul.f32 %v1054, %v1324
  %vm1326 = vcmp.eq.f32.partialorder %v1054, inf
  %v1327 = vsel %vm1326, %v1054, %v1325
  %vm1328 = vcmp.eq.f32.partialorder %v1054, 0.0
  %v1329 = vand.u32 %v1054, 2147483648
  %v1330 = vsel %vm1328, %v1329, %v1327
  %v1331 = vrsqrt.pop %v1055
  %v1332 = vmul.f32 %v1055, %v1331
  %vm1333 = vcmp.eq.f32.partialorder %v1055, inf
  %v1334 = vsel %vm1333, %v1055, %v1332
  %vm1335 = vcmp.eq.f32.partialorder %v1055, 0.0
  %v1336 = vand.u32 %v1055, 2147483648
  %v1337 = vsel %vm1335, %v1336, %v1334
  %v1338 = vrsqrt.pop %v1056
  %v1339 = vmul.f32 %v1056, %v1338
  %vm1340 = vcmp.eq.f32.partialorder %v1056, inf
  %v1341 = vsel %vm1340, %v1056, %v1339
  %vm1342 = vcmp.eq.f32.partialorder %v1056, 0.0
  %v1343 = vand.u32 %v1056, 2147483648
  %v1344 = vsel %vm1342, %v1343, %v1341
  %v1345 = vrsqrt.pop %v1057
  %v1346 = vmul.f32 %v1057, %v1345
  %vm1347 = vcmp.eq.f32.partialorder %v1057, inf
  %v1348 = vsel %vm1347, %v1057, %v1346
  %vm1349 = vcmp.eq.f32.partialorder %v1057, 0.0
  %v1350 = vand.u32 %v1057, 2147483648
  %v1351 = vsel %vm1349, %v1350, %v1348
  %v1352 = vrsqrt.pop %v1058
  %v1353 = vmul.f32 %v1058, %v1352
  %vm1354 = vcmp.eq.f32.partialorder %v1058, inf
  %v1355 = vsel %vm1354, %v1058, %v1353
  %vm1356 = vcmp.eq.f32.partialorder %v1058, 0.0
  %v1357 = vand.u32 %v1058, 2147483648
  %v1358 = vsel %vm1356, %v1357, %v1355
  %v1359 = vrsqrt.pop %v1059
  %v1360 = vmul.f32 %v1059, %v1359
  %vm1361 = vcmp.eq.f32.partialorder %v1059, inf
  %v1362 = vsel %vm1361, %v1059, %v1360
  %vm1363 = vcmp.eq.f32.partialorder %v1059, 0.0
  %v1364 = vand.u32 %v1059, 2147483648
  %v1365 = vsel %vm1363, %v1364, %v1362
  %v1366 = vrsqrt.pop %v1060
  %v1367 = vmul.f32 %v1060, %v1366
  %vm1368 = vcmp.eq.f32.partialorder %v1060, inf
  %v1369 = vsel %vm1368, %v1060, %v1367
  %vm1370 = vcmp.eq.f32.partialorder %v1060, 0.0
  %v1371 = vand.u32 %v1060, 2147483648
  %v1372 = vsel %vm1370, %v1371, %v1369
  %v1373 = vrsqrt.pop %v1061
  %v1374 = vmul.f32 %v1061, %v1373
  %vm1375 = vcmp.eq.f32.partialorder %v1061, inf
  %v1376 = vsel %vm1375, %v1061, %v1374
  %vm1377 = vcmp.eq.f32.partialorder %v1061, 0.0
  %v1378 = vand.u32 %v1061, 2147483648
  %v1379 = vsel %vm1377, %v1378, %v1376
  %v1380 = vrsqrt.pop %v1062
  %v1381 = vmul.f32 %v1062, %v1380
  %vm1382 = vcmp.eq.f32.partialorder %v1062, inf
  %v1383 = vsel %vm1382, %v1062, %v1381
  %vm1384 = vcmp.eq.f32.partialorder %v1062, 0.0
  %v1385 = vand.u32 %v1062, 2147483648
  %v1386 = vsel %vm1384, %v1385, %v1383
  %v1387 = vrsqrt.pop %v1063
  %v1388 = vmul.f32 %v1063, %v1387
  %vm1389 = vcmp.eq.f32.partialorder %v1063, inf
  %v1390 = vsel %vm1389, %v1063, %v1388
  %vm1391 = vcmp.eq.f32.partialorder %v1063, 0.0
  %v1392 = vand.u32 %v1063, 2147483648
  %v1393 = vsel %vm1391, %v1392, %v1390
  %v1394 = vrsqrt.pop %v1064
  %v1395 = vmul.f32 %v1064, %v1394
  %vm1396 = vcmp.eq.f32.partialorder %v1064, inf
  %v1397 = vsel %vm1396, %v1064, %v1395
  %vm1398 = vcmp.eq.f32.partialorder %v1064, 0.0
  %v1399 = vand.u32 %v1064, 2147483648
  %v1400 = vsel %vm1398, %v1399, %v1397
  %vm1401 = vcmask 1047554
  %v1402 = vsel %vm1401, %v1017, 0.0
  %v1403 = vsel %vm1401, %v1020, 0.0
  %v1404 = vadd.f32 %v1402, %v1403
  %v1405 = vsel %vm1401, %v1023, 0.0
  %v1406 = vadd.f32 %v1404, %v1405
  %v1407 = vsel %vm1401, %v1026, 0.0
  %v1408 = vadd.f32 %v1406, %v1407
  %v1409 = vsel %vm1401, %v1029, 0.0
  %v1410 = vadd.f32 %v1408, %v1409
  %v1411 = vsel %vm1401, %v1032, 0.0
  %v1412 = vadd.f32 %v1410, %v1411
  %v1413 = vsel %vm1401, %v1035, 0.0
  %v1414 = vadd.f32 %v1412, %v1413
  %v1415 = vsel %vm1401, %v1038, 0.0
  %v1416 = vadd.f32 %v1414, %v1415
  %v1417 = vsel %vm1401, %v1041, 0.0
  %v1418 = vadd.f32 %v1416, %v1417
  %v1419 = vsel %vm1401, %v1044, 0.0
  %v1420 = vadd.f32 %v1418, %v1419
  %v1421 = vsel %vm1401, %v1047, 0.0
  %v1422 = vadd.f32 %v1420, %v1421
  %v1423 = vsel %vm1401, %v1050, 0.0
  %v1424 = vadd.f32 %v1422, %v1423
  %v1425 = vsel %vm1401, %v1053, 0.0
  %v1426 = vadd.f32 %v1424, %v1425
  %v1427 = vsel %vm1401, %v1056, 0.0
  %v1428 = vadd.f32 %v1426, %v1427
  %v1429 = vsel %vm1401, %v1059, 0.0
  %v1430 = vadd.f32 %v1428, %v1429
  %v1431 = vsel %vm1401, %v1062, 0.0
  %v1432 = vadd.f32 %v1430, %v1431
  %v1433 = vadd.f32 %v1018, %v1021
  %v1434 = vadd.f32 %v1433, %v1024
  %v1435 = vadd.f32 %v1434, %v1027
  %v1436 = vadd.f32 %v1435, %v1030
  %v1437 = vadd.f32 %v1436, %v1033
  %v1438 = vadd.f32 %v1437, %v1036
  %v1439 = vadd.f32 %v1438, %v1039
  %v1440 = vadd.f32 %v1439, %v1042
  %v1441 = vadd.f32 %v1440, %v1045
  %v1442 = vadd.f32 %v1441, %v1048
  %v1443 = vadd.f32 %v1442, %v1051
  %v1444 = vadd.f32 %v1443, %v1054
  %v1445 = vadd.f32 %v1444, %v1057
  %v1446 = vadd.f32 %v1445, %v1060
  %v1447 = vadd.f32 %v1446, %v1063
  %v1448 = vsel %vm448, %v1019, 0.0
  %v1449 = vsel %vm448, %v1022, 0.0
  %v1450 = vadd.f32 %v1448, %v1449
  %v1451 = vsel %vm448, %v1025, 0.0
  %v1452 = vadd.f32 %v1450, %v1451
  %v1453 = vsel %vm448, %v1028, 0.0
  %v1454 = vadd.f32 %v1452, %v1453
  %v1455 = vsel %vm448, %v1031, 0.0
  %v1456 = vadd.f32 %v1454, %v1455
  %v1457 = vsel %vm448, %v1034, 0.0
  %v1458 = vadd.f32 %v1456, %v1457
  %v1459 = vsel %vm448, %v1037, 0.0
  %v1460 = vadd.f32 %v1458, %v1459
  %v1461 = vsel %vm448, %v1040, 0.0
  %v1462 = vadd.f32 %v1460, %v1461
  %v1463 = vsel %vm448, %v1043, 0.0
  %v1464 = vadd.f32 %v1462, %v1463
  %v1465 = vsel %vm448, %v1046, 0.0
  %v1466 = vadd.f32 %v1464, %v1465
  %v1467 = vsel %vm448, %v1049, 0.0
  %v1468 = vadd.f32 %v1466, %v1467
  %v1469 = vsel %vm448, %v1052, 0.0
  %v1470 = vadd.f32 %v1468, %v1469
  %v1471 = vsel %vm448, %v1055, 0.0
  %v1472 = vadd.f32 %v1470, %v1471
  %v1473 = vsel %vm448, %v1058, 0.0
  %v1474 = vadd.f32 %v1472, %v1473
  %v1475 = vsel %vm448, %v1061, 0.0
  %v1476 = vadd.f32 %v1474, %v1475
  %v1477 = vsel %vm448, %v1064, 0.0
  %v1478 = vadd.f32 %v1476, %v1477
  %vm1482 = vcmask 1045504
  %v1483 = vrot.slane %v1432, 2
  %v1484 = vrot.slane %v1447, 2
  %v1485 = vsel %vm1482, %v1483, %v1484
  %v1486 = vrot.slane %v1478, 2
  %v1487 = vsel %vm1482, %v1484, %v1486
  %v1490 = vadd.f32 %v1485, %v1487
  %v1491 = vrot.slane %v1490, 4
  %v1492 = vadd.f32 %v1490, %v1491
  %v1493 = vrot.slane %v1492, 2
  %v1494 = vadd.f32 %v1492, %v1493
  %v1495 = vrot.slane %v1494, 1
  %v1496 = vadd.f32 %v1494, %v1495
  %v1497 = vsel %vm1401, %v1071, 0.0
  %v1498 = vsel %vm1401, %v1092, 0.0
  %v1499 = vadd.f32 %v1497, %v1498
  %v1500 = vsel %vm1401, %v1113, 0.0
  %v1501 = vadd.f32 %v1499, %v1500
  %v1502 = vsel %vm1401, %v1134, 0.0
  %v1503 = vadd.f32 %v1501, %v1502
  %v1504 = vsel %vm1401, %v1155, 0.0
  %v1505 = vadd.f32 %v1503, %v1504
  %v1506 = vsel %vm1401, %v1176, 0.0
  %v1507 = vadd.f32 %v1505, %v1506
  %v1508 = vsel %vm1401, %v1197, 0.0
  %v1509 = vadd.f32 %v1507, %v1508
  %v1510 = vsel %vm1401, %v1218, 0.0
  %v1511 = vadd.f32 %v1509, %v1510
  %v1512 = vsel %vm1401, %v1239, 0.0
  %v1513 = vadd.f32 %v1511, %v1512
  %v1514 = vsel %vm1401, %v1260, 0.0
  %v1515 = vadd.f32 %v1513, %v1514
  %v1516 = vsel %vm1401, %v1281, 0.0
  %v1517 = vadd.f32 %v1515, %v1516
  %v1518 = vsel %vm1401, %v1302, 0.0
  %v1519 = vadd.f32 %v1517, %v1518
  %v1520 = vsel %vm1401, %v1323, 0.0
  %v1521 = vadd.f32 %v1519, %v1520
  %v1522 = vsel %vm1401, %v1344, 0.0
  %v1523 = vadd.f32 %v1521, %v1522
  %v1524 = vsel %vm1401, %v1365, 0.0
  %v1525 = vadd.f32 %v1523, %v1524
  %v1526 = vsel %vm1401, %v1386, 0.0
  %v1527 = vadd.f32 %v1525, %v1526
  %v1528 = vadd.f32 %v1078, %v1099
  %v1529 = vadd.f32 %v1528, %v1120
  %v1530 = vadd.f32 %v1529, %v1141
  %v1531 = vadd.f32 %v1530, %v1162
  %v1532 = vadd.f32 %v1531, %v1183
  %v1533 = vadd.f32 %v1532, %v1204
  %v1534 = vadd.f32 %v1533, %v1225
  %v1535 = vadd.f32 %v1534, %v1246
  %v1536 = vadd.f32 %v1535, %v1267
  %v1537 = vadd.f32 %v1536, %v1288
  %v1538 = vadd.f32 %v1537, %v1309
  %v1539 = vadd.f32 %v1538, %v1330
  %v1540 = vadd.f32 %v1539, %v1351
  %v1541 = vadd.f32 %v1540, %v1372
  %v1542 = vadd.f32 %v1541, %v1393
  %v1543 = vsel %vm448, %v1085, 0.0
  %v1544 = vsel %vm448, %v1106, 0.0
  %v1545 = vadd.f32 %v1543, %v1544
  %v1546 = vsel %vm448, %v1127, 0.0
  %v1547 = vadd.f32 %v1545, %v1546
  %v1548 = vsel %vm448, %v1148, 0.0
  %v1549 = vadd.f32 %v1547, %v1548
  %v1550 = vsel %vm448, %v1169, 0.0
  %v1551 = vadd.f32 %v1549, %v1550
  %v1552 = vsel %vm448, %v1190, 0.0
  %v1553 = vadd.f32 %v1551, %v1552
  %v1554 = vsel %vm448, %v1211, 0.0
  %v1555 = vadd.f32 %v1553, %v1554
  %v1556 = vsel %vm448, %v1232, 0.0
  %v1557 = vadd.f32 %v1555, %v1556
  %v1558 = vsel %vm448, %v1253, 0.0
  %v1559 = vadd.f32 %v1557, %v1558
  %v1560 = vsel %vm448, %v1274, 0.0
  %v1561 = vadd.f32 %v1559, %v1560
  %v1562 = vsel %vm448, %v1295, 0.0
  %v1563 = vadd.f32 %v1561, %v1562
  %v1564 = vsel %vm448, %v1316, 0.0
  %v1565 = vadd.f32 %v1563, %v1564
  %v1566 = vsel %vm448, %v1337, 0.0
  %v1567 = vadd.f32 %v1565, %v1566
  %v1568 = vsel %vm448, %v1358, 0.0
  %v1569 = vadd.f32 %v1567, %v1568
  %v1570 = vsel %vm448, %v1379, 0.0
  %v1571 = vadd.f32 %v1569, %v1570
  %v1572 = vsel %vm448, %v1400, 0.0
  %v1573 = vadd.f32 %v1571, %v1572
  %v1577 = vrot.slane %v1527, 2
  %v1578 = vrot.slane %v1542, 2
  %v1579 = vsel %vm1482, %v1577, %v1578
  %v1580 = vrot.slane %v1573, 2
  %v1581 = vsel %vm1482, %v1578, %v1580
  %v1584 = vadd.f32 %v1579, %v1581
  %v1585 = vrot.slane %v1584, 4
  %v1586 = vadd.f32 %v1584, %v1585
  %v1587 = vrot.slane %v1586, 2
  %v1588 = vadd.f32 %v1586, %v1587
  %v1589 = vrot.slane %v1588, 1
  %v1590 = vadd.f32 %v1588, %v1589
  %v1591 = vmul.f32 %v1496, 0.00390625
  %v1592 = vmul.f32 %v1590, 0.00390625
  %v1593 = vmul.f32 %v1592, %v1592
  %v1594 = vsub.f32 %v1591, %v1593
  %v1595 = vmax.f32 %v1594, 0.0
  %v1596 = vrsqrt.pop %v1595
  %v1597 = vmul.f32 %v1595, %v1596
  %vm1598 = vcmp.eq.f32.partialorder %v1595, inf
  %v1599 = vsel %vm1598, %v1595, %v1597
  %vm1600 = vcmp.eq.f32.partialorder %v1595, 0.0
  %v1601 = vand.u32 %v1595, 2147483648
  %v1602 = vsel %vm1600, %v1601, %v1599
  %1603 = vst [vmem:[%s1] sm:$0x1] %v1602
  // Predicated region
  $region6: #{si_forward.1} parent=0 // pred_check
    _
  $region7: #{si_forward.1} parent=0 // pred_check_branch
    %1605 = sbr.rel (0) target = $region9
  $region8: #{si_forward.1} parent=0 // pred_region
    _
  $region9: #{si_forward.1} parent=0 // pred_fallthru
    _
  // Predicated region
  $region10: #{si_forward.1} parent=0 // pred_check
    _
  $region11: #{si_forward.1} parent=0 // pred_check_branch
    %1607 = sbr.rel (0) target = $region13
  $region12: #{si_forward.1} parent=0 // pred_region
    _
  $region13: #{si_forward.1} parent=0 // pred_fallthru
    _

</llo_original>
